<compile_context>
chip_gen: v7x
topology: tpu7x:2x2x1
jax: 0.10.0
libtpu: 0.0.40
codegen_flags: <defaults>
</compile_context>

<pallas_src>
import jax
import jax.numpy as jnp
from jax.experimental import pallas as pl
from jax.experimental.pallas import tpu as pltpu

IN_DIM = 28 * 28          # 784
H1, H2, H3 = 512, 256, 128
OUT_DIM = 10
OUT_PAD = 128             # lane-dense padded output width


def _cdiv(a, b):
    return -(-a // b)


def _round_up(n, m):
    return _cdiv(n, m) * m


def _pick_batch_tile(B, max_tb=1024):
    """Batch tile: large (amortize per-step overhead), >=2 grid steps when B > 16
    (v7x megacore), multiple of 16 (bf16 sublane packing), small round-up waste."""
    if B <= 16:
        return _round_up(B, 8)
    n_tiles = max(2, _cdiv(B, max_tb))
    return _round_up(_cdiv(B, n_tiles), 16)


def fcnet_kernel(x_ref, w1_ref, b1_ref, w2_ref, b2_ref,
                 w3_ref, b3_ref, w4_ref, b4_ref, o_ref):
    # Four MXU matmuls, bf16 inputs, f32 accumulation; bias + ReLU in f32, recast to
    # bf16 for the next MXU pass.  All weights are VMEM-resident across grid steps.
    x = x_ref[...].astype(jnp.bfloat16)      # per-tile cast (VPU), hidden under MXU/DMA

    h = jnp.dot(x, w1_ref[...], preferred_element_type=jnp.float32) + b1_ref[...]
    h = jnp.maximum(h, 0.0).astype(jnp.bfloat16)

    h = jnp.dot(h, w2_ref[...], preferred_element_type=jnp.float32) + b2_ref[...]
    h = jnp.maximum(h, 0.0).astype(jnp.bfloat16)

    h = jnp.dot(h, w3_ref[...], preferred_element_type=jnp.float32) + b3_ref[...]
    h = jnp.maximum(h, 0.0).astype(jnp.bfloat16)

    out = jnp.dot(h, w4_ref[...], preferred_element_type=jnp.float32) + b4_ref[...]
    o_ref[...] = out.astype(o_ref.dtype)     # (TB, 128) lane-dense bf16 store


def prepare_params(params):
    """One-time (call OUTSIDE jit) conversion of f32 params to kernel layout:
    bf16 (in, out) weights, f32 (1, out) biases, last layer zero-padded to 128 lanes."""
    w1, b1, w2, b2, w3, b3, w4, b4 = params
    return (
        w1.astype(jnp.bfloat16), b1.astype(jnp.float32),
        w2.astype(jnp.bfloat16), b2.astype(jnp.float32),
        w3.astype(jnp.bfloat16), b3.astype(jnp.float32),
        jnp.pad(w4, ((0, 0), (0, OUT_PAD - OUT_DIM))).astype(jnp.bfloat16),
        jnp.pad(b4, ((0, 0), (0, OUT_PAD - OUT_DIM))).astype(jnp.float32),
    )


def fcnet_forward(x_nchw, prepared_params, *, max_tb=1024):
    """x_nchw: (B, 1, 28, 28) float32.  prepared_params from prepare_params().
    Returns (B, 10) float32 (eval-mode forward)."""
    B = x_nchw.shape[0]
    x = x_nchw.reshape(B, IN_DIM)            # same as nn.Flatten (row-major); stays f32

    tb = _pick_batch_tile(B, max_tb)
    grid = (_cdiv(B, tb),)                   # partial last tile masked by Pallas; no x pad

    w1, b1, w2, b2, w3, b3, w4, b4 = prepared_params

    def const(i):      # weights/biases: same block every grid step -> VMEM-resident
        return (0, 0)

    out_padded = pl.pallas_call(
        fcnet_kernel,
        out_shape=jax.ShapeDtypeStruct((B, OUT_PAD), jnp.bfloat16),
        grid_spec=pltpu.PrefetchScalarGridSpec(
            num_scalar_prefetch=0,
            grid=grid,
            in_specs=[
                pl.BlockSpec((tb, IN_DIM), lambda i: (i, 0)),   # streamed f32 x tile
                pl.BlockSpec((IN_DIM, H1), const),
                pl.BlockSpec((1, H1), const),
                pl.BlockSpec((H1, H2), const),
                pl.BlockSpec((1, H2), const),
                pl.BlockSpec((H2, H3), const),
                pl.BlockSpec((1, H3), const),
                pl.BlockSpec((H3, OUT_PAD), const),
                pl.BlockSpec((1, OUT_PAD), const),
            ],
            out_specs=pl.BlockSpec((tb, OUT_PAD), lambda i: (i, 0)),
        ),
        compiler_params=pltpu.CompilerParams(
            dimension_semantics=("parallel",),      # megacore sharding on v7x
            vmem_limit_bytes=32 * 1024 * 1024,      # ~9 MiB used at TB=1024; ample everywhere
        ),
    )(x, w1, b1, w2, b2, w3, b3, w4, b4)

    return out_padded[:, :OUT_DIM].astype(jnp.float32)


def init_params(key):
    """Deterministic init. PyTorch Linear stores W as (out, in) and computes x @ W.T + b;
    we store the transposed (in, out) weight so the kernel does x @ W + b (same math)."""
    dims = [(IN_DIM, H1), (H1, H2), (H2, H3), (H3, OUT_DIM)]
    params = []
    for (fan_in, fan_out) in dims:
        key, kw, kb = jax.random.split(key, 3)
        bound = 1.0 / jnp.sqrt(fan_in)
        w = jax.random.uniform(kw, (fan_in, fan_out), jnp.float32, -bound, bound)
        b = jax.random.uniform(kb, (1, fan_out), jnp.float32, -bound, bound)
        params += [w, b]
    return tuple(params)


if __name__ == "__main__":
    key = jax.random.PRNGKey(0)
    key, kx = jax.random.split(key)

    # MNIST-style input at a small shape: (batch=8, 1, 28, 28).
    x = jax.random.normal(kx, (8, 1, 28, 28), jnp.float32)
    params = init_params(key)
    prepared = prepare_params(params)        # one-time bf16 cast / pad, outside jit

    fwd = jax.jit(fcnet_forward)
    y = fwd(x, prepared)
    jax.block_until_ready(y)

    assert y.shape == (8, 10) and y.dtype == jnp.float32

    # Pure-JAX f32 reference of the same eval-mode forward (dropout = identity).
    # Tolerance reflects the intentional bf16-input / f32-accumulate MXU precision.
    def ref(x, p):
        w1, b1, w2, b2, w3, b3, w4, b4 = p
        h = x.reshape(x.shape[0], -1)
        h = jnp.maximum(h @ w1 + b1, 0.0)
        h = jnp.maximum(h @ w2 + b2, 0.0)
        h = jnp.maximum(h @ w3 + b3, 0.0)
        return h @ w4 + b4

    y_ref = ref(x, params)
    assert jnp.allclose(y, y_ref, atol=5e-2, rtol=5e-2), (
        float(jnp.max(jnp.abs(y - y_ref))))

    print("KERNEL_OK")
</pallas_src>

<mosaic_0001>
module attributes {stable_mosaic.version = 11 : i64} {
  func.func @fcnet_kernel(%arg0: i32, %arg1: memref<8x784xf32, #tpu.memory_space<vmem>>, %arg2: memref<784x512xbf16, #tpu.memory_space<vmem>>, %arg3: memref<1x512xf32, #tpu.memory_space<vmem>>, %arg4: memref<512x256xbf16, #tpu.memory_space<vmem>>, %arg5: memref<1x256xf32, #tpu.memory_space<vmem>>, %arg6: memref<256x128xbf16, #tpu.memory_space<vmem>>, %arg7: memref<1x128xf32, #tpu.memory_space<vmem>>, %arg8: memref<128x128xbf16, #tpu.memory_space<vmem>>, %arg9: memref<1x128xf32, #tpu.memory_space<vmem>>, %arg10: memref<8x128xbf16, #tpu.memory_space<vmem>>) attributes {dimension_semantics = [#tpu.dimension_semantics<parallel>], iteration_bounds = array<i64: 1>, scalar_prefetch = 0 : i64, scratch_operands = 0 : i64, tpu.core_type = #tpu.core_type<tc>, window_params = [{transform_indices = @transform_0, window_bounds = array<i64: 8, 784>}, {pipeline_mode = #tpu.pipeline_mode<synchronous>, transform_indices = @transform_1, window_bounds = array<i64: 784, 512>}, {pipeline_mode = #tpu.pipeline_mode<synchronous>, transform_indices = @transform_2, window_bounds = array<i64: 1, 512>}, {pipeline_mode = #tpu.pipeline_mode<synchronous>, transform_indices = @transform_3, window_bounds = array<i64: 512, 256>}, {pipeline_mode = #tpu.pipeline_mode<synchronous>, transform_indices = @transform_4, window_bounds = array<i64: 1, 256>}, {pipeline_mode = #tpu.pipeline_mode<synchronous>, transform_indices = @transform_5, window_bounds = array<i64: 256, 128>}, {pipeline_mode = #tpu.pipeline_mode<synchronous>, transform_indices = @transform_6, window_bounds = array<i64: 1, 128>}, {pipeline_mode = #tpu.pipeline_mode<synchronous>, transform_indices = @transform_7, window_bounds = array<i64: 128, 128>}, {pipeline_mode = #tpu.pipeline_mode<synchronous>, transform_indices = @transform_8, window_bounds = array<i64: 1, 128>}, {transform_indices = @transform_9, window_bounds = array<i64: 8, 128>}]} {
    %c0 = arith.constant 0 : index
    %c0_0 = arith.constant 0 : index
    %0 = vector.load %arg1[%c0, %c0_0] : memref<8x784xf32, #tpu.memory_space<vmem>>, vector<8x784xf32>
    %1 = arith.truncf %0 : vector<8x784xf32> to vector<8x784xbf16>
    %c0_1 = arith.constant 0 : index
    %c0_2 = arith.constant 0 : index
    %2 = vector.load %arg2[%c0_1, %c0_2] : memref<784x512xbf16, #tpu.memory_space<vmem>>, vector<784x512xbf16>
    %cst = arith.constant dense<0.000000e+00> : vector<8x512xf32>
    %3 = tpu.matmul %1, %2, %cst {dimension_numbers = #tpu.dot_dimension_numbers<[1], [0], [0], [1], [0, 0, 1, 1], [], []>} : vector<8x784xbf16>, vector<784x512xbf16>, vector<8x512xf32> -> vector<8x512xf32>
    %c0_3 = arith.constant 0 : index
    %c0_4 = arith.constant 0 : index
    %4 = vector.load %arg3[%c0_3, %c0_4] : memref<1x512xf32, #tpu.memory_space<vmem>>, vector<1x512xf32>
    %5 = vector.broadcast %4 : vector<1x512xf32> to vector<8x512xf32>
    %6 = arith.addf %3, %5 : vector<8x512xf32>
    %cst_5 = arith.constant 0.000000e+00 : f32
    %7 = vector.broadcast %cst_5 : f32 to vector<8x512xf32>
    %8 = arith.maximumf %6, %7 : vector<8x512xf32>
    %9 = arith.truncf %8 : vector<8x512xf32> to vector<8x512xbf16>
    %c0_6 = arith.constant 0 : index
    %c0_7 = arith.constant 0 : index
    %10 = vector.load %arg4[%c0_6, %c0_7] : memref<512x256xbf16, #tpu.memory_space<vmem>>, vector<512x256xbf16>
    %cst_8 = arith.constant dense<0.000000e+00> : vector<8x256xf32>
    %11 = tpu.matmul %9, %10, %cst_8 {dimension_numbers = #tpu.dot_dimension_numbers<[1], [0], [0], [1], [0, 0, 1, 1], [], []>} : vector<8x512xbf16>, vector<512x256xbf16>, vector<8x256xf32> -> vector<8x256xf32>
    %c0_9 = arith.constant 0 : index
    %c0_10 = arith.constant 0 : index
    %12 = vector.load %arg5[%c0_9, %c0_10] : memref<1x256xf32, #tpu.memory_space<vmem>>, vector<1x256xf32>
    %13 = vector.broadcast %12 : vector<1x256xf32> to vector<8x256xf32>
    %14 = arith.addf %11, %13 : vector<8x256xf32>
    %cst_11 = arith.constant 0.000000e+00 : f32
    %15 = vector.broadcast %cst_11 : f32 to vector<8x256xf32>
    %16 = arith.maximumf %14, %15 : vector<8x256xf32>
    %17 = arith.truncf %16 : vector<8x256xf32> to vector<8x256xbf16>
    %c0_12 = arith.constant 0 : index
    %c0_13 = arith.constant 0 : index
    %18 = vector.load %arg6[%c0_12, %c0_13] : memref<256x128xbf16, #tpu.memory_space<vmem>>, vector<256x128xbf16>
    %cst_14 = arith.constant dense<0.000000e+00> : vector<8x128xf32>
    %19 = tpu.matmul %17, %18, %cst_14 {dimension_numbers = #tpu.dot_dimension_numbers<[1], [0], [0], [1], [0, 0, 1, 1], [], []>} : vector<8x256xbf16>, vector<256x128xbf16>, vector<8x128xf32> -> vector<8x128xf32>
    %c0_15 = arith.constant 0 : index
    %c0_16 = arith.constant 0 : index
    %20 = vector.load %arg7[%c0_15, %c0_16] : memref<1x128xf32, #tpu.memory_space<vmem>>, vector<1x128xf32>
    %21 = vector.broadcast %20 : vector<1x128xf32> to vector<8x128xf32>
    %22 = arith.addf %19, %21 : vector<8x128xf32>
    %cst_17 = arith.constant 0.000000e+00 : f32
    %23 = vector.broadcast %cst_17 : f32 to vector<8x128xf32>
    %24 = arith.maximumf %22, %23 : vector<8x128xf32>
    %25 = arith.truncf %24 : vector<8x128xf32> to vector<8x128xbf16>
    %c0_18 = arith.constant 0 : index
    %c0_19 = arith.constant 0 : index
    %26 = vector.load %arg8[%c0_18, %c0_19] : memref<128x128xbf16, #tpu.memory_space<vmem>>, vector<128x128xbf16>
    %cst_20 = arith.constant dense<0.000000e+00> : vector<8x128xf32>
    %27 = tpu.matmul %25, %26, %cst_20 {dimension_numbers = #tpu.dot_dimension_numbers<[1], [0], [0], [1], [0, 0, 1, 1], [], []>} : vector<8x128xbf16>, vector<128x128xbf16>, vector<8x128xf32> -> vector<8x128xf32>
    %c0_21 = arith.constant 0 : index
    %c0_22 = arith.constant 0 : index
    %28 = vector.load %arg9[%c0_21, %c0_22] : memref<1x128xf32, #tpu.memory_space<vmem>>, vector<1x128xf32>
    %29 = vector.broadcast %28 : vector<1x128xf32> to vector<8x128xf32>
    %30 = arith.addf %27, %29 : vector<8x128xf32>
    %31 = arith.truncf %30 : vector<8x128xf32> to vector<8x128xbf16>
    %c0_23 = arith.constant 0 : index
    %c0_24 = arith.constant 0 : index
    %32 = vector.load %arg10[%c0_23, %c0_24] : memref<8x128xbf16, #tpu.memory_space<vmem>>, vector<8x128xbf16>
    tpu.vector_store %arg10[%c0_23, %c0_24], %31 {strides = array<i32>} : memref<8x128xbf16, #tpu.memory_space<vmem>>, vector<8x128xbf16>,
    return
  }
  func.func @transform_0(%arg0: i32) -> (i32, i32) {
    %c0_i32 = arith.constant 0 : i32
    %c0_i32_0 = arith.constant 0 : i32
    return %arg0, %c0_i32 : i32, i32
  }
  func.func @transform_1(%arg0: i32) -> (i32, i32) {
    %c0_i32 = arith.constant 0 : i32
    %c0_i32_0 = arith.constant 0 : i32
    %c0_i32_1 = arith.constant 0 : i32
    return %c0_i32, %c0_i32_0 : i32, i32
  }
  func.func @transform_2(%arg0: i32) -> (i32, i32) {
    %c0_i32 = arith.constant 0 : i32
    %c0_i32_0 = arith.constant 0 : i32
    %c0_i32_1 = arith.constant 0 : i32
    return %c0_i32, %c0_i32_0 : i32, i32
  }
  func.func @transform_3(%arg0: i32) -> (i32, i32) {
    %c0_i32 = arith.constant 0 : i32
    %c0_i32_0 = arith.constant 0 : i32
    %c0_i32_1 = arith.constant 0 : i32
    return %c0_i32, %c0_i32_0 : i32, i32
  }
  func.func @transform_4(%arg0: i32) -> (i32, i32) {
    %c0_i32 = arith.constant 0 : i32
    %c0_i32_0 = arith.constant 0 : i32
    %c0_i32_1 = arith.constant 0 : i32
    return %c0_i32, %c0_i32_0 : i32, i32
  }
  func.func @transform_5(%arg0: i32) -> (i32, i32) {
    %c0_i32 = arith.constant 0 : i32
    %c0_i32_0 = arith.constant 0 : i32
    %c0_i32_1 = arith.constant 0 : i32
    return %c0_i32, %c0_i32_0 : i32, i32
  }
  func.func @transform_6(%arg0: i32) -> (i32, i32) {
    %c0_i32 = arith.constant 0 : i32
    %c0_i32_0 = arith.constant 0 : i32
    %c0_i32_1 = arith.constant 0 : i32
    return %c0_i32, %c0_i32_0 : i32, i32
  }
  func.func @transform_7(%arg0: i32) -> (i32, i32) {
    %c0_i32 = arith.constant 0 : i32
    %c0_i32_0 = arith.constant 0 : i32
    %c0_i32_1 = arith.constant 0 : i32
    return %c0_i32, %c0_i32_0 : i32, i32
  }
  func.func @transform_8(%arg0: i32) -> (i32, i32) {
    %c0_i32 = arith.constant 0 : i32
    %c0_i32_0 = arith.constant 0 : i32
    %c0_i32_1 = arith.constant 0 : i32
    return %c0_i32, %c0_i32_0 : i32, i32
  }
  func.func @transform_9(%arg0: i32) -> (i32, i32) {
    %c0_i32 = arith.constant 0 : i32
    %c0_i32_0 = arith.constant 0 : i32
    return %arg0, %c0_i32 : i32, i32
  }
}

</mosaic_0001>

<llo_original>
// kernel: fcnet_forward.1
$region0: #{fcnet_forward.1}
  #allocation0 [shape = 'u32[]', space=smem, size = 0x4, offset = 0x4, fixed_abs, tag = 'smem constant byte address 0x4 - core index']
  #allocation1 [shape = 'u32[144,128]{1,0:T(1,128)}', space=vmem, size = 0x12000, scoped, tag = 'internal scratch']
  %s0 = inlined_call_operand.vmem [shape: f32[8,784], index: 0, kind: input, shape index: {}]
  %s1 = inlined_call_operand.hbm [shape: bf16[784,512], index: 1, kind: input, shape index: {}]
  %s2 = inlined_call_operand.vmem [shape: f32[1,512], index: 2, kind: input, shape index: {}]
  %s3 = inlined_call_operand.vmem [shape: bf16[512,256], index: 3, kind: input, shape index: {}]
  %s4 = inlined_call_operand.vmem [shape: f32[1,256], index: 4, kind: input, shape index: {}]
  %s5 = inlined_call_operand.vmem [shape: bf16[256,128], index: 5, kind: input, shape index: {}]
  %s6 = inlined_call_operand.vmem [shape: f32[1,128], index: 6, kind: input, shape index: {}]
  %s7 = inlined_call_operand.vmem [shape: bf16[128,128], index: 7, kind: input, shape index: {}]
  %s8 = inlined_call_operand.vmem [shape: f32[1,128], index: 8, kind: input, shape index: {}]
  %s9 = inlined_call_operand.vmem [shape: bf16[8,128], index: 9, kind: output, shape index: {}]
  %s10 = sld [smem:[#allocation0]]
  $region50: #{fcnet_forward.1} parent=0
    _
  %s12 = ssub.s32 1, %s10
  %s13 = scalar_select 0, %s12, %s10
  $region1: #{fcnet_forward.1} parent=0
    #allocation2 [shape = 'u8[802816]{0}', space=vmem, size = 0xc4000, scoped, tag = 'input window, operand 1, single buffered']
    #allocation3 [shape = 's32[1]{0}', space=sflag, size = 0x4, scoped, tag = 'scoped memory for fcnet_forward.1']
    %14 = vsyncpa [#allocation3], 0
    // Predicated region
    $region2: #{fcnet_forward.1} parent=1 // pred_check
      _
    $region3: #{fcnet_forward.1} parent=1 // pred_check_branch
      %16 = sbr.rel (0) target = $region5
    $region4: #{fcnet_forward.1} parent=1 // pred_region
      _
    $region5: #{fcnet_forward.1} parent=1 // pred_fallthru
      _
    // Predicated region
    $region6: #{fcnet_forward.1} parent=1 // pred_check
      _
    $region7: #{fcnet_forward.1} parent=1 // pred_check_branch
      %18 = sbr.rel (0) target = $region9
    $region8: #{fcnet_forward.1} parent=1 // pred_region
      %s20 = ssub.s32 25088, 25088
      %21 = vsyncadd [#allocation3], %s20
      %s22 = sshll.u32 [#allocation2], 4
      %s23 = int_to_ptr.vmem [resolvable:$true] %s22
      %28 = dma.hbm_to_vmem [thread:$0]  %s1, 25088, %s23, [#allocation3], 256, 256, 16
    $region9: #{fcnet_forward.1} parent=1 // pred_fallthru
      _
    // Predicated region
    $region10: #{fcnet_forward.1} parent=1 // pred_check
      _
    $region11: #{fcnet_forward.1} parent=1 // pred_check_branch
      %30 = sbr.rel (0) target = $region13
    $region12: #{fcnet_forward.1} parent=1 // pred_region
      _
    $region13: #{fcnet_forward.1} parent=1 // pred_fallthru
      _
    // Predicated region
    $region14: #{fcnet_forward.1} parent=1 // pred_check
      _
    $region15: #{fcnet_forward.1} parent=1 // pred_check_branch
      %32 = sbr.rel (0) target = $region17
    $region16: #{fcnet_forward.1} parent=1 // pred_region
      _
    $region17: #{fcnet_forward.1} parent=1 // pred_fallthru
      _
    // Predicated region
    $region18: #{fcnet_forward.1} parent=1 // pred_check
      _
    $region19: #{fcnet_forward.1} parent=1 // pred_check_branch
      %34 = sbr.rel (0) target = $region21
    $region20: #{fcnet_forward.1} parent=1 // pred_region
      _
    $region21: #{fcnet_forward.1} parent=1 // pred_fallthru
      _
    // Predicated region
    $region22: #{fcnet_forward.1} parent=1 // pred_check
      _
    $region23: #{fcnet_forward.1} parent=1 // pred_check_branch
      %36 = sbr.rel (0) target = $region25
    $region24: #{fcnet_forward.1} parent=1 // pred_region
      _
    $region25: #{fcnet_forward.1} parent=1 // pred_fallthru
      _
    // Predicated region
    $region26: #{fcnet_forward.1} parent=1 // pred_check
      _
    $region27: #{fcnet_forward.1} parent=1 // pred_check_branch
      %38 = sbr.rel (0) target = $region29
    $region28: #{fcnet_forward.1} parent=1 // pred_region
      _
    $region29: #{fcnet_forward.1} parent=1 // pred_fallthru
      _
    // Predicated region
    $region30: #{fcnet_forward.1} parent=1 // pred_check
      _
    $region31: #{fcnet_forward.1} parent=1 // pred_check_branch
      %40 = sbr.rel (0) target = $region33
    $region32: #{fcnet_forward.1} parent=1 // pred_region
      _
    $region33: #{fcnet_forward.1} parent=1 // pred_fallthru
      _
    // Predicated region
    $region34: #{fcnet_forward.1} parent=1 // pred_check
      _
    $region35: #{fcnet_forward.1} parent=1 // pred_check_branch
      %42 = sbr.rel (0) target = $region37
    $region36: #{fcnet_forward.1} parent=1 // pred_region
      _
    $region37: #{fcnet_forward.1} parent=1 // pred_fallthru
      _
    // Predicated region
    $region38: #{fcnet_forward.1} parent=1 // pred_check
      _
    $region39: #{fcnet_forward.1} parent=1 // pred_check_branch
      %44 = sbr.rel (0) target = $region41
    $region40: #{fcnet_forward.1} parent=1 // pred_region
      %45 = dma.done [#allocation3], 25088
    $region41: #{fcnet_forward.1} parent=1 // pred_fallthru
      _
    %v47 = vld [vmem:[%s0] sm:$0xff]
    %v48 = vld [vmem:[%s0 + $0x8] sm:$0xff]
    %v49 = vld [vmem:[%s0 + $0x10] sm:$0xff]
    %v50 = vld [vmem:[%s0 + $0x18] sm:$0xff]
    %v51 = vld [vmem:[%s0 + $0x20] sm:$0xff]
    %v52 = vld [vmem:[%s0 + $0x28] sm:$0xff]
    %v53 = vld [vmem:[%s0 + $0x30] sm:$0xff]
    %v54 = vpack.c.bf16 %v47, %v47
    %v55 = vpack.c.bf16 %v48, %v48
    %v56 = vpack.c.bf16 %v49, %v49
    %v57 = vpack.c.bf16 %v50, %v50
    %v58 = vpack.c.bf16 %v51, %v51
    %v59 = vpack.c.bf16 %v52, %v52
    %v60 = vpack.c.bf16 %v53, %v53
    %v61 = vld [vmem:[#allocation2] sm:$0xff]
    %v62 = vld [vmem:[#allocation2 + $0x8] sm:$0xff]
    %v63 = vld [vmem:[#allocation2 + $0x10] sm:$0xff]
    %v64 = vld [vmem:[#allocation2 + $0x18] sm:$0xff]
    %v65 = vld [vmem:[#allocation2 + $0x20] sm:$0xff]
    %v66 = vld [vmem:[#allocation2 + $0x28] sm:$0xff]
    %v67 = vld [vmem:[#allocation2 + $0x30] sm:$0xff]
    %v68 = vld [vmem:[#allocation2 + $0x38] sm:$0xff]
    %v69 = vld [vmem:[#allocation2 + $0x40] sm:$0xff]
    %v70 = vld [vmem:[#allocation2 + $0x48] sm:$0xff]
    %v71 = vld [vmem:[#allocation2 + $0x50] sm:$0xff]
    %v72 = vld [vmem:[#allocation2 + $0x58] sm:$0xff]
    %v73 = vld [vmem:[#allocation2 + $0x60] sm:$0xff]
    %v74 = vld [vmem:[#allocation2 + $0x68] sm:$0xff]
    %v75 = vld [vmem:[#allocation2 + $0x70] sm:$0xff]
    %v76 = vld [vmem:[#allocation2 + $0x78] sm:$0xff]
    %v77 = vld [vmem:[#allocation2 + $0x80] sm:$0xff]
    %v78 = vld [vmem:[#allocation2 + $0x88] sm:$0xff]
    %v79 = vld [vmem:[#allocation2 + $0x90] sm:$0xff]
    %v80 = vld [vmem:[#allocation2 + $0x98] sm:$0xff]
    %v81 = vld [vmem:[#allocation2 + $0xa0] sm:$0xff]
    %v82 = vld [vmem:[#allocation2 + $0xa8] sm:$0xff]
    %v83 = vld [vmem:[#allocation2 + $0xb0] sm:$0xff]
    %v84 = vld [vmem:[#allocation2 + $0xb8] sm:$0xff]
    %v85 = vld [vmem:[#allocation2 + $0xc0] sm:$0xff]
    %v86 = vld [vmem:[#allocation2 + $0xc8] sm:$0xff]
    %v87 = vld [vmem:[#allocation2 + $0xd0] sm:$0xff]
    %v88 = vld [vmem:[#allocation2 + $0xd8] sm:$0xff]
    %v89 = vld [vmem:[#allocation2 + $0xe0] sm:$0xff]
    %v90 = vld [vmem:[#allocation2 + $0xe8] sm:$0xff]
    %v91 = vld [vmem:[#allocation2 + $0xf0] sm:$0xff]
    %v92 = vld [vmem:[#allocation2 + $0xf8] sm:$0xff]
    %v93 = vld [vmem:[#allocation2 + $0x100] sm:$0xff]
    %v94 = vld [vmem:[#allocation2 + $0x108] sm:$0xff]
    %v95 = vld [vmem:[#allocation2 + $0x110] sm:$0xff]
    %v96 = vld [vmem:[#allocation2 + $0x118] sm:$0xff]
    %v97 = vld [vmem:[#allocation2 + $0x120] sm:$0xff]
    %v98 = vld [vmem:[#allocation2 + $0x128] sm:$0xff]
    %v99 = vld [vmem:[#allocation2 + $0x130] sm:$0xff]
    %v100 = vld [vmem:[#allocation2 + $0x138] sm:$0xff]
    %v101 = vld [vmem:[#allocation2 + $0x140] sm:$0xff]
    %v102 = vld [vmem:[#allocation2 + $0x148] sm:$0xff]
    %v103 = vld [vmem:[#allocation2 + $0x150] sm:$0xff]
    %v104 = vld [vmem:[#allocation2 + $0x158] sm:$0xff]
    %v105 = vld [vmem:[#allocation2 + $0x160] sm:$0xff]
    %v106 = vld [vmem:[#allocation2 + $0x168] sm:$0xff]
    %v107 = vld [vmem:[#allocation2 + $0x170] sm:$0xff]
    %v108 = vld [vmem:[#allocation2 + $0x178] sm:$0xff]
    %v109 = vld [vmem:[#allocation2 + $0x180] sm:$0xff]
    %v110 = vld [vmem:[#allocation2 + $0x188] sm:$0xff]
    %v111 = vld [vmem:[#allocation2 + $0x190] sm:$0xff]
    %v112 = vld [vmem:[#allocation2 + $0x198] sm:$0xff]
    %v113 = vld [vmem:[#allocation2 + $0x1a0] sm:$0xff]
    %v114 = vld [vmem:[#allocation2 + $0x1a8] sm:$0xff]
    %v115 = vld [vmem:[#allocation2 + $0x1b0] sm:$0xff]
    %v116 = vld [vmem:[#allocation2 + $0x1b8] sm:$0xff]
    %v117 = vld [vmem:[#allocation2 + $0x1c0] sm:$0xff]
    %v118 = vld [vmem:[#allocation2 + $0x1c8] sm:$0xff]
    %v119 = vld [vmem:[#allocation2 + $0x1d0] sm:$0xff]
    %v120 = vld [vmem:[#allocation2 + $0x1d8] sm:$0xff]
    %v121 = vld [vmem:[#allocation2 + $0x1e0] sm:$0xff]
    %v122 = vld [vmem:[#allocation2 + $0x1e8] sm:$0xff]
    %v123 = vld [vmem:[#allocation2 + $0x1f0] sm:$0xff]
    %v124 = vld [vmem:[#allocation2 + $0x1f8] sm:$0xff]
    %v125 = vld [vmem:[#allocation2 + $0x200] sm:$0xff]
    %v126 = vld [vmem:[#allocation2 + $0x208] sm:$0xff]
    %v127 = vld [vmem:[#allocation2 + $0x210] sm:$0xff]
    %v128 = vld [vmem:[#allocation2 + $0x218] sm:$0xff]
    %v129 = vld [vmem:[#allocation2 + $0x220] sm:$0xff]
    %v130 = vld [vmem:[#allocation2 + $0x228] sm:$0xff]
    %v131 = vld [vmem:[#allocation2 + $0x230] sm:$0xff]
    %v132 = vld [vmem:[#allocation2 + $0x238] sm:$0xff]
    %v133 = vld [vmem:[#allocation2 + $0x240] sm:$0xff]
    %v134 = vld [vmem:[#allocation2 + $0x248] sm:$0xff]
    %v135 = vld [vmem:[#allocation2 + $0x250] sm:$0xff]
    %v136 = vld [vmem:[#allocation2 + $0x258] sm:$0xff]
    %v137 = vld [vmem:[#allocation2 + $0x260] sm:$0xff]
    %v138 = vld [vmem:[#allocation2 + $0x268] sm:$0xff]
    %v139 = vld [vmem:[#allocation2 + $0x270] sm:$0xff]
    %v140 = vld [vmem:[#allocation2 + $0x278] sm:$0xff]
    %v141 = vld [vmem:[#allocation2 + $0x280] sm:$0xff]
    %v142 = vld [vmem:[#allocation2 + $0x288] sm:$0xff]
    %v143 = vld [vmem:[#allocation2 + $0x290] sm:$0xff]
    %v144 = vld [vmem:[#allocation2 + $0x298] sm:$0xff]
    %v145 = vld [vmem:[#allocation2 + $0x2a0] sm:$0xff]
    %v146 = vld [vmem:[#allocation2 + $0x2a8] sm:$0xff]
    %v147 = vld [vmem:[#allocation2 + $0x2b0] sm:$0xff]
    %v148 = vld [vmem:[#allocation2 + $0x2b8] sm:$0xff]
    %v149 = vld [vmem:[#allocation2 + $0x2c0] sm:$0xff]
    %v150 = vld [vmem:[#allocation2 + $0x2c8] sm:$0xff]
    %v151 = vld [vmem:[#allocation2 + $0x2d0] sm:$0xff]
    %v152 = vld [vmem:[#allocation2 + $0x2d8] sm:$0xff]
    %v153 = vld [vmem:[#allocation2 + $0x2e0] sm:$0xff]
    %v154 = vld [vmem:[#allocation2 + $0x2e8] sm:$0xff]
    %v155 = vld [vmem:[#allocation2 + $0x2f0] sm:$0xff]
    %v156 = vld [vmem:[#allocation2 + $0x2f8] sm:$0xff]
    %v157 = vld [vmem:[#allocation2 + $0x300] sm:$0xff]
    %v158 = vld [vmem:[#allocation2 + $0x308] sm:$0xff]
    %v159 = vld [vmem:[#allocation2 + $0x310] sm:$0xff]
    %v160 = vld [vmem:[#allocation2 + $0x318] sm:$0xff]
    %v161 = vld [vmem:[#allocation2 + $0x320] sm:$0xff]
    %v162 = vld [vmem:[#allocation2 + $0x328] sm:$0xff]
    %v163 = vld [vmem:[#allocation2 + $0x330] sm:$0xff]
    %v164 = vld [vmem:[#allocation2 + $0x338] sm:$0xff]
    %v165 = vld [vmem:[#allocation2 + $0x340] sm:$0xff]
    %v166 = vld [vmem:[#allocation2 + $0x348] sm:$0xff]
    %v167 = vld [vmem:[#allocation2 + $0x350] sm:$0xff]
    %v168 = vld [vmem:[#allocation2 + $0x358] sm:$0xff]
    %v169 = vld [vmem:[#allocation2 + $0x360] sm:$0xff]
    %v170 = vld [vmem:[#allocation2 + $0x368] sm:$0xff]
    %v171 = vld [vmem:[#allocation2 + $0x370] sm:$0xff]
    %v172 = vld [vmem:[#allocation2 + $0x378] sm:$0xff]
    %v173 = vld [vmem:[#allocation2 + $0x380] sm:$0xff]
    %v174 = vld [vmem:[#allocation2 + $0x388] sm:$0xff]
    %v175 = vld [vmem:[#allocation2 + $0x390] sm:$0xff]
    %v176 = vld [vmem:[#allocation2 + $0x398] sm:$0xff]
    %v177 = vld [vmem:[#allocation2 + $0x3a0] sm:$0xff]
    %v178 = vld [vmem:[#allocation2 + $0x3a8] sm:$0xff]
    %v179 = vld [vmem:[#allocation2 + $0x3b0] sm:$0xff]
    %v180 = vld [vmem:[#allocation2 + $0x3b8] sm:$0xff]
    %v181 = vld [vmem:[#allocation2 + $0x3c0] sm:$0xff]
    %v182 = vld [vmem:[#allocation2 + $0x3c8] sm:$0xff]
    %v183 = vld [vmem:[#allocation2 + $0x3d0] sm:$0xff]
    %v184 = vld [vmem:[#allocation2 + $0x3d8] sm:$0xff]
    %v185 = vld [vmem:[#allocation2 + $0x3e0] sm:$0xff]
    %v186 = vld [vmem:[#allocation2 + $0x3e8] sm:$0xff]
    %v187 = vld [vmem:[#allocation2 + $0x3f0] sm:$0xff]
    %v188 = vld [vmem:[#allocation2 + $0x3f8] sm:$0xff]
    %v189 = vld [vmem:[#allocation2 + $0x400] sm:$0xff]
    %v190 = vld [vmem:[#allocation2 + $0x408] sm:$0xff]
    %v191 = vld [vmem:[#allocation2 + $0x410] sm:$0xff]
    %v192 = vld [vmem:[#allocation2 + $0x418] sm:$0xff]
    %v193 = vld [vmem:[#allocation2 + $0x420] sm:$0xff]
    %v194 = vld [vmem:[#allocation2 + $0x428] sm:$0xff]
    %v195 = vld [vmem:[#allocation2 + $0x430] sm:$0xff]
    %v196 = vld [vmem:[#allocation2 + $0x438] sm:$0xff]
    %v197 = vld [vmem:[#allocation2 + $0x440] sm:$0xff]
    %v198 = vld [vmem:[#allocation2 + $0x448] sm:$0xff]
    %v199 = vld [vmem:[#allocation2 + $0x450] sm:$0xff]
    %v200 = vld [vmem:[#allocation2 + $0x458] sm:$0xff]
    %v201 = vld [vmem:[#allocation2 + $0x460] sm:$0xff]
    %v202 = vld [vmem:[#allocation2 + $0x468] sm:$0xff]
    %v203 = vld [vmem:[#allocation2 + $0x470] sm:$0xff]
    %v204 = vld [vmem:[#allocation2 + $0x478] sm:$0xff]
    %v205 = vld [vmem:[#allocation2 + $0x480] sm:$0xff]
    %v206 = vld [vmem:[#allocation2 + $0x488] sm:$0xff]
    %v207 = vld [vmem:[#allocation2 + $0x490] sm:$0xff]
    %v208 = vld [vmem:[#allocation2 + $0x498] sm:$0xff]
    %v209 = vld [vmem:[#allocation2 + $0x4a0] sm:$0xff]
    %v210 = vld [vmem:[#allocation2 + $0x4a8] sm:$0xff]
    %v211 = vld [vmem:[#allocation2 + $0x4b0] sm:$0xff]
    %v212 = vld [vmem:[#allocation2 + $0x4b8] sm:$0xff]
    %v213 = vld [vmem:[#allocation2 + $0x4c0] sm:$0xff]
    %v214 = vld [vmem:[#allocation2 + $0x4c8] sm:$0xff]
    %v215 = vld [vmem:[#allocation2 + $0x4d0] sm:$0xff]
    %v216 = vld [vmem:[#allocation2 + $0x4d8] sm:$0xff]
    %v217 = vld [vmem:[#allocation2 + $0x4e0] sm:$0xff]
    %v218 = vld [vmem:[#allocation2 + $0x4e8] sm:$0xff]
    %v219 = vld [vmem:[#allocation2 + $0x4f0] sm:$0xff]
    %v220 = vld [vmem:[#allocation2 + $0x4f8] sm:$0xff]
    %v221 = vld [vmem:[#allocation2 + $0x500] sm:$0xff]
    %v222 = vld [vmem:[#allocation2 + $0x508] sm:$0xff]
    %v223 = vld [vmem:[#allocation2 + $0x510] sm:$0xff]
    %v224 = vld [vmem:[#allocation2 + $0x518] sm:$0xff]
    %v225 = vld [vmem:[#allocation2 + $0x520] sm:$0xff]
    %v226 = vld [vmem:[#allocation2 + $0x528] sm:$0xff]
    %v227 = vld [vmem:[#allocation2 + $0x530] sm:$0xff]
    %v228 = vld [vmem:[#allocation2 + $0x538] sm:$0xff]
    %v229 = vld [vmem:[#allocation2 + $0x540] sm:$0xff]
    %v230 = vld [vmem:[#allocation2 + $0x548] sm:$0xff]
    %v231 = vld [vmem:[#allocation2 + $0x550] sm:$0xff]
    %v232 = vld [vmem:[#allocation2 + $0x558] sm:$0xff]
    %v233 = vld [vmem:[#allocation2 + $0x560] sm:$0xff]
    %v234 = vld [vmem:[#allocation2 + $0x568] sm:$0xff]
    %v235 = vld [vmem:[#allocation2 + $0x570] sm:$0xff]
    %v236 = vld [vmem:[#allocation2 + $0x578] sm:$0xff]
    %v237 = vld [vmem:[#allocation2 + $0x580] sm:$0xff]
    %v238 = vld [vmem:[#allocation2 + $0x588] sm:$0xff]
    %v239 = vld [vmem:[#allocation2 + $0x590] sm:$0xff]
    %v240 = vld [vmem:[#allocation2 + $0x598] sm:$0xff]
    %v241 = vld [vmem:[#allocation2 + $0x5a0] sm:$0xff]
    %v242 = vld [vmem:[#allocation2 + $0x5a8] sm:$0xff]
    %v243 = vld [vmem:[#allocation2 + $0x5b0] sm:$0xff]
    %v244 = vld [vmem:[#allocation2 + $0x5b8] sm:$0xff]
    %v245 = vld [vmem:[#allocation2 + $0x5c0] sm:$0xff]
    %v246 = vld [vmem:[#allocation2 + $0x5c8] sm:$0xff]
    %v247 = vld [vmem:[#allocation2 + $0x5d0] sm:$0xff]
    %v248 = vld [vmem:[#allocation2 + $0x5d8] sm:$0xff]
    %v249 = vld [vmem:[#allocation2 + $0x5e0] sm:$0xff]
    %v250 = vld [vmem:[#allocation2 + $0x5e8] sm:$0xff]
    %v251 = vld [vmem:[#allocation2 + $0x5f0] sm:$0xff]
    %v252 = vld [vmem:[#allocation2 + $0x5f8] sm:$0xff]
    %v253 = vld [vmem:[#allocation2 + $0x600] sm:$0xff]
    %v254 = vld [vmem:[#allocation2 + $0x608] sm:$0xff]
    %v255 = vld [vmem:[#allocation2 + $0x610] sm:$0xff]
    %v256 = vld [vmem:[#allocation2 + $0x618] sm:$0xff]
    %v257 = vld [vmem:[%s2] sm:$0xf]
    %v259 = vlaneseq
    %v260 = vshrl.u32 %v259, 7
    %v261 = vsub.s32 0, %v260
    %v262 = vrot.slane %v257, %v261
    %v263 = vlaneseq
    %v264 = vshrl.u32 %v263, 7
    %v265 = vsub.s32 1, %v264
    %v266 = vrot.slane %v257, %v265
    %v267 = vlaneseq
    %v268 = vshrl.u32 %v267, 7
    %v269 = vsub.s32 2, %v268
    %v270 = vrot.slane %v257, %v269
    %v271 = vlaneseq
    %v272 = vshrl.u32 %v271, 7
    %v273 = vsub.s32 3, %v272
    %v274 = vrot.slane %v257, %v273
    %v475 = vunpack.c.l.b16 %v61
    %v476 = vunpack.c.h.b16 %v61
    %v477 = vunpack.c.l.b16 %v62
    %v478 = vunpack.c.h.b16 %v62
    %v479 = vunpack.c.l.b16 %v63
    %v480 = vunpack.c.h.b16 %v63
    %v481 = vunpack.c.l.b16 %v64
    %v482 = vunpack.c.h.b16 %v64
    %v483 = vunpack.c.l.b16 %v65
    %v484 = vunpack.c.h.b16 %v65
    %v485 = vunpack.c.l.b16 %v66
    %v486 = vunpack.c.h.b16 %v66
    %v487 = vunpack.c.l.b16 %v67
    %v488 = vunpack.c.h.b16 %v67
    %v489 = vunpack.c.l.b16 %v68
    %v490 = vunpack.c.h.b16 %v68
    %v491 = vunpack.c.l.b16 %v69
    %v492 = vunpack.c.h.b16 %v69
    %v493 = vunpack.c.l.b16 %v70
    %v494 = vunpack.c.h.b16 %v70
    %v495 = vunpack.c.l.b16 %v71
    %v496 = vunpack.c.h.b16 %v71
    %v497 = vunpack.c.l.b16 %v72
    %v498 = vunpack.c.h.b16 %v72
    %v499 = vunpack.c.l.b16 %v73
    %v500 = vunpack.c.h.b16 %v73
    %v501 = vunpack.c.l.b16 %v74
    %v502 = vunpack.c.h.b16 %v74
    %v503 = vunpack.c.l.b16 %v75
    %v504 = vunpack.c.h.b16 %v75
    %v505 = vunpack.c.l.b16 %v76
    %v506 = vunpack.c.h.b16 %v76
    %v507 = vunpack.c.l.b16 %v77
    %v508 = vunpack.c.h.b16 %v77
    %v509 = vunpack.c.l.b16 %v78
    %v510 = vunpack.c.h.b16 %v78
    %v511 = vunpack.c.l.b16 %v79
    %v512 = vunpack.c.h.b16 %v79
    %v513 = vunpack.c.l.b16 %v80
    %v514 = vunpack.c.h.b16 %v80
    %v515 = vunpack.c.l.b16 %v81
    %v516 = vunpack.c.h.b16 %v81
    %v517 = vunpack.c.l.b16 %v82
    %v518 = vunpack.c.h.b16 %v82
    %v519 = vunpack.c.l.b16 %v83
    %v520 = vunpack.c.h.b16 %v83
    %v521 = vunpack.c.l.b16 %v84
    %v522 = vunpack.c.h.b16 %v84
    %v523 = vunpack.c.l.b16 %v85
    %v524 = vunpack.c.h.b16 %v85
    %v525 = vunpack.c.l.b16 %v86
    %v526 = vunpack.c.h.b16 %v86
    %v527 = vunpack.c.l.b16 %v87
    %v528 = vunpack.c.h.b16 %v87
    %v529 = vunpack.c.l.b16 %v88
    %v530 = vunpack.c.h.b16 %v88
    %v531 = vunpack.c.l.b16 %v89
    %v532 = vunpack.c.h.b16 %v89
    %v533 = vunpack.c.l.b16 %v90
    %v534 = vunpack.c.h.b16 %v90
    %v535 = vunpack.c.l.b16 %v91
    %v536 = vunpack.c.h.b16 %v91
    %v537 = vunpack.c.l.b16 %v92
    %v538 = vunpack.c.h.b16 %v92
    %v539 = vunpack.c.l.b16 %v93
    %v540 = vunpack.c.h.b16 %v93
    %v541 = vunpack.c.l.b16 %v94
    %v542 = vunpack.c.h.b16 %v94
    %v543 = vunpack.c.l.b16 %v95
    %v544 = vunpack.c.h.b16 %v95
    %v545 = vunpack.c.l.b16 %v96
    %v546 = vunpack.c.h.b16 %v96
    %v547 = vunpack.c.l.b16 %v97
    %v548 = vunpack.c.h.b16 %v97
    %v549 = vunpack.c.l.b16 %v98
    %v550 = vunpack.c.h.b16 %v98
    %v551 = vunpack.c.l.b16 %v99
    %v552 = vunpack.c.h.b16 %v99
    %v553 = vunpack.c.l.b16 %v100
    %v554 = vunpack.c.h.b16 %v100
    %v555 = vunpack.c.l.b16 %v101
    %v556 = vunpack.c.h.b16 %v101
    %v557 = vunpack.c.l.b16 %v102
    %v558 = vunpack.c.h.b16 %v102
    %v559 = vunpack.c.l.b16 %v103
    %v560 = vunpack.c.h.b16 %v103
    %v561 = vunpack.c.l.b16 %v104
    %v562 = vunpack.c.h.b16 %v104
    %v563 = vunpack.c.l.b16 %v105
    %v564 = vunpack.c.h.b16 %v105
    %v565 = vunpack.c.l.b16 %v106
    %v566 = vunpack.c.h.b16 %v106
    %v567 = vunpack.c.l.b16 %v107
    %v568 = vunpack.c.h.b16 %v107
    %v569 = vunpack.c.l.b16 %v108
    %v570 = vunpack.c.h.b16 %v108
    %v571 = vunpack.c.l.b16 %v109
    %v572 = vunpack.c.h.b16 %v109
    %v573 = vunpack.c.l.b16 %v110
    %v574 = vunpack.c.h.b16 %v110
    %v575 = vunpack.c.l.b16 %v111
    %v576 = vunpack.c.h.b16 %v111
    %v577 = vunpack.c.l.b16 %v112
    %v578 = vunpack.c.h.b16 %v112
    %v579 = vunpack.c.l.b16 %v113
    %v580 = vunpack.c.h.b16 %v113
    %v581 = vunpack.c.l.b16 %v114
    %v582 = vunpack.c.h.b16 %v114
    %v583 = vunpack.c.l.b16 %v115
    %v584 = vunpack.c.h.b16 %v115
    %v585 = vunpack.c.l.b16 %v116
    %v586 = vunpack.c.h.b16 %v116
    %v587 = vunpack.c.l.b16 %v117
    %v588 = vunpack.c.h.b16 %v117
    %v589 = vunpack.c.l.b16 %v118
    %v590 = vunpack.c.h.b16 %v118
    %v591 = vunpack.c.l.b16 %v119
    %v592 = vunpack.c.h.b16 %v119
    %v593 = vunpack.c.l.b16 %v120
    %v594 = vunpack.c.h.b16 %v120
    %v595 = vunpack.c.l.b16 %v121
    %v596 = vunpack.c.h.b16 %v121
    %v597 = vunpack.c.l.b16 %v122
    %v598 = vunpack.c.h.b16 %v122
    %v599 = vunpack.c.l.b16 %v123
    %v600 = vunpack.c.h.b16 %v123
    %v601 = vunpack.c.l.b16 %v124
    %v602 = vunpack.c.h.b16 %v124
    %v603 = vunpack.c.l.b16 %v125
    %v604 = vunpack.c.h.b16 %v125
    %v605 = vunpack.c.l.b16 %v126
    %v606 = vunpack.c.h.b16 %v126
    %v607 = vunpack.c.l.b16 %v127
    %v608 = vunpack.c.h.b16 %v127
    %v609 = vunpack.c.l.b16 %v128
    %v610 = vunpack.c.h.b16 %v128
    %v611 = vunpack.c.l.b16 %v129
    %v612 = vunpack.c.h.b16 %v129
    %v613 = vunpack.c.l.b16 %v130
    %v614 = vunpack.c.h.b16 %v130
    %v615 = vunpack.c.l.b16 %v131
    %v616 = vunpack.c.h.b16 %v131
    %v617 = vunpack.c.l.b16 %v132
    %v618 = vunpack.c.h.b16 %v132
    %v619 = vunpack.c.l.b16 %v133
    %v620 = vunpack.c.h.b16 %v133
    %v621 = vunpack.c.l.b16 %v134
    %v622 = vunpack.c.h.b16 %v134
    %v623 = vunpack.c.l.b16 %v135
    %v624 = vunpack.c.h.b16 %v135
    %v625 = vunpack.c.l.b16 %v136
    %v626 = vunpack.c.h.b16 %v136
    %v627 = vunpack.c.l.b16 %v137
    %v628 = vunpack.c.h.b16 %v137
    %v629 = vunpack.c.l.b16 %v138
    %v630 = vunpack.c.h.b16 %v138
    %v631 = vunpack.c.l.b16 %v139
    %v632 = vunpack.c.h.b16 %v139
    %v633 = vunpack.c.l.b16 %v140
    %v634 = vunpack.c.h.b16 %v140
    %v635 = vunpack.c.l.b16 %v141
    %v636 = vunpack.c.h.b16 %v141
    %v637 = vunpack.c.l.b16 %v142
    %v638 = vunpack.c.h.b16 %v142
    %v639 = vunpack.c.l.b16 %v143
    %v640 = vunpack.c.h.b16 %v143
    %v641 = vunpack.c.l.b16 %v144
    %v642 = vunpack.c.h.b16 %v144
    %v643 = vunpack.c.l.b16 %v145
    %v644 = vunpack.c.h.b16 %v145
    %v645 = vunpack.c.l.b16 %v146
    %v646 = vunpack.c.h.b16 %v146
    %v647 = vunpack.c.l.b16 %v147
    %v648 = vunpack.c.h.b16 %v147
    %v649 = vunpack.c.l.b16 %v148
    %v650 = vunpack.c.h.b16 %v148
    %v651 = vunpack.c.l.b16 %v149
    %v652 = vunpack.c.h.b16 %v149
    %v653 = vunpack.c.l.b16 %v150
    %v654 = vunpack.c.h.b16 %v150
    %v655 = vunpack.c.l.b16 %v151
    %v656 = vunpack.c.h.b16 %v151
    %v657 = vunpack.c.l.b16 %v152
    %v658 = vunpack.c.h.b16 %v152
    %v659 = vunpack.c.l.b16 %v153
    %v660 = vunpack.c.h.b16 %v153
    %v661 = vunpack.c.l.b16 %v154
    %v662 = vunpack.c.h.b16 %v154
    %v663 = vunpack.c.l.b16 %v155
    %v664 = vunpack.c.h.b16 %v155
    %v665 = vunpack.c.l.b16 %v156
    %v666 = vunpack.c.h.b16 %v156
    %v667 = vunpack.c.l.b16 %v157
    %v668 = vunpack.c.h.b16 %v157
    %v669 = vunpack.c.l.b16 %v158
    %v670 = vunpack.c.h.b16 %v158
    %v671 = vunpack.c.l.b16 %v159
    %v672 = vunpack.c.h.b16 %v159
    %v673 = vunpack.c.l.b16 %v160
    %v674 = vunpack.c.h.b16 %v160
    %v675 = vunpack.c.l.b16 %v161
    %v676 = vunpack.c.h.b16 %v161
    %v677 = vunpack.c.l.b16 %v162
    %v678 = vunpack.c.h.b16 %v162
    %v679 = vunpack.c.l.b16 %v163
    %v680 = vunpack.c.h.b16 %v163
    %v681 = vunpack.c.l.b16 %v164
    %v682 = vunpack.c.h.b16 %v164
    %v683 = vunpack.c.l.b16 %v165
    %v684 = vunpack.c.h.b16 %v165
    %v685 = vunpack.c.l.b16 %v166
    %v686 = vunpack.c.h.b16 %v166
    %v687 = vunpack.c.l.b16 %v167
    %v688 = vunpack.c.h.b16 %v167
    %v689 = vunpack.c.l.b16 %v168
    %v690 = vunpack.c.h.b16 %v168
    %v691 = vunpack.c.l.b16 %v169
    %v692 = vunpack.c.h.b16 %v169
    %v693 = vunpack.c.l.b16 %v170
    %v694 = vunpack.c.h.b16 %v170
    %v695 = vunpack.c.l.b16 %v171
    %v696 = vunpack.c.h.b16 %v171
    %v697 = vunpack.c.l.b16 %v172
    %v698 = vunpack.c.h.b16 %v172
    %v699 = vunpack.c.l.b16 %v173
    %v700 = vunpack.c.h.b16 %v173
    %v701 = vunpack.c.l.b16 %v174
    %v702 = vunpack.c.h.b16 %v174
    %v703 = vunpack.c.l.b16 %v175
    %v704 = vunpack.c.h.b16 %v175
    %v705 = vunpack.c.l.b16 %v176
    %v706 = vunpack.c.h.b16 %v176
    %v707 = vunpack.c.l.b16 %v177
    %v708 = vunpack.c.h.b16 %v177
    %v709 = vunpack.c.l.b16 %v178
    %v710 = vunpack.c.h.b16 %v178
    %v711 = vunpack.c.l.b16 %v179
    %v712 = vunpack.c.h.b16 %v179
    %v713 = vunpack.c.l.b16 %v180
    %v714 = vunpack.c.h.b16 %v180
    %v715 = vunpack.c.l.b16 %v181
    %v716 = vunpack.c.h.b16 %v181
    %v717 = vunpack.c.l.b16 %v182
    %v718 = vunpack.c.h.b16 %v182
    %v719 = vunpack.c.l.b16 %v183
    %v720 = vunpack.c.h.b16 %v183
    %v721 = vunpack.c.l.b16 %v184
    %v722 = vunpack.c.h.b16 %v184
    %v723 = vunpack.c.l.b16 %v185
    %v724 = vunpack.c.h.b16 %v185
    %v725 = vunpack.c.l.b16 %v186
    %v726 = vunpack.c.h.b16 %v186
    %v727 = vunpack.c.l.b16 %v187
    %v728 = vunpack.c.h.b16 %v187
    %v729 = vunpack.c.l.b16 %v188
    %v730 = vunpack.c.h.b16 %v188
    %v731 = vunpack.c.l.b16 %v189
    %v732 = vunpack.c.h.b16 %v189
    %v733 = vunpack.c.l.b16 %v190
    %v734 = vunpack.c.h.b16 %v190
    %v735 = vunpack.c.l.b16 %v191
    %v736 = vunpack.c.h.b16 %v191
    %v737 = vunpack.c.l.b16 %v192
    %v738 = vunpack.c.h.b16 %v192
    %v739 = vunpack.c.l.b16 %v193
    %v740 = vunpack.c.h.b16 %v193
    %v741 = vunpack.c.l.b16 %v194
    %v742 = vunpack.c.h.b16 %v194
    %v743 = vunpack.c.l.b16 %v195
    %v744 = vunpack.c.h.b16 %v195
    %v745 = vunpack.c.l.b16 %v196
    %v746 = vunpack.c.h.b16 %v196
    %v747 = vunpack.c.l.b16 %v197
    %v748 = vunpack.c.h.b16 %v197
    %v749 = vunpack.c.l.b16 %v198
    %v750 = vunpack.c.h.b16 %v198
    %v751 = vunpack.c.l.b16 %v199
    %v752 = vunpack.c.h.b16 %v199
    %v753 = vunpack.c.l.b16 %v200
    %v754 = vunpack.c.h.b16 %v200
    %v755 = vunpack.c.l.b16 %v201
    %v756 = vunpack.c.h.b16 %v201
    %v757 = vunpack.c.l.b16 %v202
    %v758 = vunpack.c.h.b16 %v202
    %v759 = vunpack.c.l.b16 %v203
    %v760 = vunpack.c.h.b16 %v203
    %v761 = vunpack.c.l.b16 %v204
    %v762 = vunpack.c.h.b16 %v204
    %v763 = vunpack.c.l.b16 %v205
    %v764 = vunpack.c.h.b16 %v205
    %v765 = vunpack.c.l.b16 %v206
    %v766 = vunpack.c.h.b16 %v206
    %v767 = vunpack.c.l.b16 %v207
    %v768 = vunpack.c.h.b16 %v207
    %v769 = vunpack.c.l.b16 %v208
    %v770 = vunpack.c.h.b16 %v208
    %v771 = vunpack.c.l.b16 %v209
    %v772 = vunpack.c.h.b16 %v209
    %v773 = vunpack.c.l.b16 %v210
    %v774 = vunpack.c.h.b16 %v210
    %v775 = vunpack.c.l.b16 %v211
    %v776 = vunpack.c.h.b16 %v211
    %v777 = vunpack.c.l.b16 %v212
    %v778 = vunpack.c.h.b16 %v212
    %v779 = vunpack.c.l.b16 %v213
    %v780 = vunpack.c.h.b16 %v213
    %v781 = vunpack.c.l.b16 %v214
    %v782 = vunpack.c.h.b16 %v214
    %v783 = vunpack.c.l.b16 %v215
    %v784 = vunpack.c.h.b16 %v215
    %v785 = vunpack.c.l.b16 %v216
    %v786 = vunpack.c.h.b16 %v216
    %v787 = vunpack.c.l.b16 %v217
    %v788 = vunpack.c.h.b16 %v217
    %v789 = vunpack.c.l.b16 %v218
    %v790 = vunpack.c.h.b16 %v218
    %v791 = vunpack.c.l.b16 %v219
    %v792 = vunpack.c.h.b16 %v219
    %v793 = vunpack.c.l.b16 %v220
    %v794 = vunpack.c.h.b16 %v220
    %v795 = vunpack.c.l.b16 %v221
    %v796 = vunpack.c.h.b16 %v221
    %v797 = vunpack.c.l.b16 %v222
    %v798 = vunpack.c.h.b16 %v222
    %v799 = vunpack.c.l.b16 %v223
    %v800 = vunpack.c.h.b16 %v223
    %v801 = vunpack.c.l.b16 %v224
    %v802 = vunpack.c.h.b16 %v224
    %v803 = vunpack.c.l.b16 %v225
    %v804 = vunpack.c.h.b16 %v225
    %v805 = vunpack.c.l.b16 %v226
    %v806 = vunpack.c.h.b16 %v226
    %v807 = vunpack.c.l.b16 %v227
    %v808 = vunpack.c.h.b16 %v227
    %v809 = vunpack.c.l.b16 %v228
    %v810 = vunpack.c.h.b16 %v228
    %v811 = vunpack.c.l.b16 %v229
    %v812 = vunpack.c.h.b16 %v229
    %v813 = vunpack.c.l.b16 %v230
    %v814 = vunpack.c.h.b16 %v230
    %v815 = vunpack.c.l.b16 %v231
    %v816 = vunpack.c.h.b16 %v231
    %v817 = vunpack.c.l.b16 %v232
    %v818 = vunpack.c.h.b16 %v232
    %v819 = vunpack.c.l.b16 %v233
    %v820 = vunpack.c.h.b16 %v233
    %v821 = vunpack.c.l.b16 %v234
    %v822 = vunpack.c.h.b16 %v234
    %v823 = vunpack.c.l.b16 %v235
    %v824 = vunpack.c.h.b16 %v235
    %v825 = vunpack.c.l.b16 %v236
    %v826 = vunpack.c.h.b16 %v236
    %v827 = vunpack.c.l.b16 %v237
    %v828 = vunpack.c.h.b16 %v237
    %v829 = vunpack.c.l.b16 %v238
    %v830 = vunpack.c.h.b16 %v238
    %v831 = vunpack.c.l.b16 %v239
    %v832 = vunpack.c.h.b16 %v239
    %v833 = vunpack.c.l.b16 %v240
    %v834 = vunpack.c.h.b16 %v240
    %v835 = vunpack.c.l.b16 %v241
    %v836 = vunpack.c.h.b16 %v241
    %v837 = vunpack.c.l.b16 %v242
    %v838 = vunpack.c.h.b16 %v242
    %v839 = vunpack.c.l.b16 %v243
    %v840 = vunpack.c.h.b16 %v243
    %v841 = vunpack.c.l.b16 %v244
    %v842 = vunpack.c.h.b16 %v244
    %v843 = vunpack.c.l.b16 %v245
    %v844 = vunpack.c.h.b16 %v245
    %v845 = vunpack.c.l.b16 %v246
    %v846 = vunpack.c.h.b16 %v246
    %v847 = vunpack.c.l.b16 %v247
    %v848 = vunpack.c.h.b16 %v247
    %v849 = vunpack.c.l.b16 %v248
    %v850 = vunpack.c.h.b16 %v248
    %v851 = vunpack.c.l.b16 %v249
    %v852 = vunpack.c.h.b16 %v249
    %v853 = vunpack.c.l.b16 %v250
    %v854 = vunpack.c.h.b16 %v250
    %v855 = vunpack.c.l.b16 %v251
    %v856 = vunpack.c.h.b16 %v251
    %v857 = vunpack.c.l.b16 %v252
    %v858 = vunpack.c.h.b16 %v252
    %v859 = vunpack.c.l.b16 %v253
    %v860 = vunpack.c.h.b16 %v253
    %v861 = vunpack.c.l.b16 %v254
    %v862 = vunpack.c.h.b16 %v254
    %v863 = vunpack.c.l.b16 %v255
    %v864 = vunpack.c.h.b16 %v255
    %v865 = vunpack.c.l.b16 %v256
    %v866 = vunpack.c.h.b16 %v256
    %v867 = vpack.c.b16 %v479, %v475
    %v868 = vpack.c.b16 %v480, %v476
    %v869 = vpack.c.b16 %v481, %v477
    %v870 = vpack.c.b16 %v482, %v478
    %v871 = vpack.c.b16 %v487, %v483
    %v872 = vpack.c.b16 %v488, %v484
    %v873 = vpack.c.b16 %v489, %v485
    %v874 = vpack.c.b16 %v490, %v486
    %v875 = vpack.c.b16 %v495, %v491
    %v876 = vpack.c.b16 %v496, %v492
    %v877 = vpack.c.b16 %v497, %v493
    %v878 = vpack.c.b16 %v498, %v494
    %v879 = vpack.c.b16 %v503, %v499
    %v880 = vpack.c.b16 %v504, %v500
    %v881 = vpack.c.b16 %v505, %v501
    %v882 = vpack.c.b16 %v506, %v502
    %v883 = vpack.c.b16 %v511, %v507
    %v884 = vpack.c.b16 %v512, %v508
    %v885 = vpack.c.b16 %v513, %v509
    %v886 = vpack.c.b16 %v514, %v510
    %v887 = vpack.c.b16 %v519, %v515
    %v888 = vpack.c.b16 %v520, %v516
    %v889 = vpack.c.b16 %v521, %v517
    %v890 = vpack.c.b16 %v522, %v518
    %v891 = vpack.c.b16 %v527, %v523
    %v892 = vpack.c.b16 %v528, %v524
    %v893 = vpack.c.b16 %v529, %v525
    %v894 = vpack.c.b16 %v530, %v526
    %v895 = vpack.c.b16 %v535, %v531
    %v896 = vpack.c.b16 %v536, %v532
    %v897 = vpack.c.b16 %v537, %v533
    %v898 = vpack.c.b16 %v538, %v534
    %v899 = vpack.c.b16 %v543, %v539
    %v900 = vpack.c.b16 %v544, %v540
    %v901 = vpack.c.b16 %v545, %v541
    %v902 = vpack.c.b16 %v546, %v542
    %v903 = vpack.c.b16 %v551, %v547
    %v904 = vpack.c.b16 %v552, %v548
    %v905 = vpack.c.b16 %v553, %v549
    %v906 = vpack.c.b16 %v554, %v550
    %v907 = vpack.c.b16 %v559, %v555
    %v908 = vpack.c.b16 %v560, %v556
    %v909 = vpack.c.b16 %v561, %v557
    %v910 = vpack.c.b16 %v562, %v558
    %v911 = vpack.c.b16 %v567, %v563
    %v912 = vpack.c.b16 %v568, %v564
    %v913 = vpack.c.b16 %v569, %v565
    %v914 = vpack.c.b16 %v570, %v566
    %v915 = vpack.c.b16 %v575, %v571
    %v916 = vpack.c.b16 %v576, %v572
    %v917 = vpack.c.b16 %v577, %v573
    %v918 = vpack.c.b16 %v578, %v574
    %v919 = vpack.c.b16 %v583, %v579
    %v920 = vpack.c.b16 %v584, %v580
    %v921 = vpack.c.b16 %v585, %v581
    %v922 = vpack.c.b16 %v586, %v582
    %v923 = vpack.c.b16 %v591, %v587
    %v924 = vpack.c.b16 %v592, %v588
    %v925 = vpack.c.b16 %v593, %v589
    %v926 = vpack.c.b16 %v594, %v590
    %v927 = vpack.c.b16 %v599, %v595
    %v928 = vpack.c.b16 %v600, %v596
    %v929 = vpack.c.b16 %v601, %v597
    %v930 = vpack.c.b16 %v602, %v598
    %v931 = vpack.c.b16 %v607, %v603
    %v932 = vpack.c.b16 %v608, %v604
    %v933 = vpack.c.b16 %v609, %v605
    %v934 = vpack.c.b16 %v610, %v606
    %v935 = vpack.c.b16 %v615, %v611
    %v936 = vpack.c.b16 %v616, %v612
    %v937 = vpack.c.b16 %v617, %v613
    %v938 = vpack.c.b16 %v618, %v614
    %v939 = vpack.c.b16 %v623, %v619
    %v940 = vpack.c.b16 %v624, %v620
    %v941 = vpack.c.b16 %v625, %v621
    %v942 = vpack.c.b16 %v626, %v622
    %v943 = vpack.c.b16 %v631, %v627
    %v944 = vpack.c.b16 %v632, %v628
    %v945 = vpack.c.b16 %v633, %v629
    %v946 = vpack.c.b16 %v634, %v630
    %v947 = vpack.c.b16 %v639, %v635
    %v948 = vpack.c.b16 %v640, %v636
    %v949 = vpack.c.b16 %v641, %v637
    %v950 = vpack.c.b16 %v642, %v638
    %v951 = vpack.c.b16 %v647, %v643
    %v952 = vpack.c.b16 %v648, %v644
    %v953 = vpack.c.b16 %v649, %v645
    %v954 = vpack.c.b16 %v650, %v646
    %v955 = vpack.c.b16 %v655, %v651
    %v956 = vpack.c.b16 %v656, %v652
    %v957 = vpack.c.b16 %v657, %v653
    %v958 = vpack.c.b16 %v658, %v654
    %v959 = vpack.c.b16 %v663, %v659
    %v960 = vpack.c.b16 %v664, %v660
    %v961 = vpack.c.b16 %v665, %v661
    %v962 = vpack.c.b16 %v666, %v662
    %v963 = vpack.c.b16 %v671, %v667
    %v964 = vpack.c.b16 %v672, %v668
    %v965 = vpack.c.b16 %v673, %v669
    %v966 = vpack.c.b16 %v674, %v670
    %v967 = vpack.c.b16 %v679, %v675
    %v968 = vpack.c.b16 %v680, %v676
    %v969 = vpack.c.b16 %v681, %v677
    %v970 = vpack.c.b16 %v682, %v678
    %v971 = vpack.c.b16 %v687, %v683
    %v972 = vpack.c.b16 %v688, %v684
    %v973 = vpack.c.b16 %v689, %v685
    %v974 = vpack.c.b16 %v690, %v686
    %v975 = vpack.c.b16 %v695, %v691
    %v976 = vpack.c.b16 %v696, %v692
    %v977 = vpack.c.b16 %v697, %v693
    %v978 = vpack.c.b16 %v698, %v694
    %v979 = vpack.c.b16 %v703, %v699
    %v980 = vpack.c.b16 %v704, %v700
    %v981 = vpack.c.b16 %v705, %v701
    %v982 = vpack.c.b16 %v706, %v702
    %v983 = vpack.c.b16 %v711, %v707
    %v984 = vpack.c.b16 %v712, %v708
    %v985 = vpack.c.b16 %v713, %v709
    %v986 = vpack.c.b16 %v714, %v710
    %v987 = vpack.c.b16 %v719, %v715
    %v988 = vpack.c.b16 %v720, %v716
    %v989 = vpack.c.b16 %v721, %v717
    %v990 = vpack.c.b16 %v722, %v718
    %v991 = vpack.c.b16 %v727, %v723
    %v992 = vpack.c.b16 %v728, %v724
    %v993 = vpack.c.b16 %v729, %v725
    %v994 = vpack.c.b16 %v730, %v726
    %v995 = vpack.c.b16 %v735, %v731
    %v996 = vpack.c.b16 %v736, %v732
    %v997 = vpack.c.b16 %v737, %v733
    %v998 = vpack.c.b16 %v738, %v734
    %v999 = vpack.c.b16 %v743, %v739
    %v1000 = vpack.c.b16 %v744, %v740
    %v1001 = vpack.c.b16 %v745, %v741
    %v1002 = vpack.c.b16 %v746, %v742
    %v1003 = vpack.c.b16 %v751, %v747
    %v1004 = vpack.c.b16 %v752, %v748
    %v1005 = vpack.c.b16 %v753, %v749
    %v1006 = vpack.c.b16 %v754, %v750
    %v1007 = vpack.c.b16 %v759, %v755
    %v1008 = vpack.c.b16 %v760, %v756
    %v1009 = vpack.c.b16 %v761, %v757
    %v1010 = vpack.c.b16 %v762, %v758
    %v1011 = vpack.c.b16 %v767, %v763
    %v1012 = vpack.c.b16 %v768, %v764
    %v1013 = vpack.c.b16 %v769, %v765
    %v1014 = vpack.c.b16 %v770, %v766
    %v1015 = vpack.c.b16 %v775, %v771
    %v1016 = vpack.c.b16 %v776, %v772
    %v1017 = vpack.c.b16 %v777, %v773
    %v1018 = vpack.c.b16 %v778, %v774
    %v1019 = vpack.c.b16 %v783, %v779
    %v1020 = vpack.c.b16 %v784, %v780
    %v1021 = vpack.c.b16 %v785, %v781
    %v1022 = vpack.c.b16 %v786, %v782
    %v1023 = vpack.c.b16 %v791, %v787
    %v1024 = vpack.c.b16 %v792, %v788
    %v1025 = vpack.c.b16 %v793, %v789
    %v1026 = vpack.c.b16 %v794, %v790
    %v1027 = vpack.c.b16 %v799, %v795
    %v1028 = vpack.c.b16 %v800, %v796
    %v1029 = vpack.c.b16 %v801, %v797
    %v1030 = vpack.c.b16 %v802, %v798
    %v1031 = vpack.c.b16 %v807, %v803
    %v1032 = vpack.c.b16 %v808, %v804
    %v1033 = vpack.c.b16 %v809, %v805
    %v1034 = vpack.c.b16 %v810, %v806
    %v1035 = vpack.c.b16 %v815, %v811
    %v1036 = vpack.c.b16 %v816, %v812
    %v1037 = vpack.c.b16 %v817, %v813
    %v1038 = vpack.c.b16 %v818, %v814
    %v1039 = vpack.c.b16 %v823, %v819
    %v1040 = vpack.c.b16 %v824, %v820
    %v1041 = vpack.c.b16 %v825, %v821
    %v1042 = vpack.c.b16 %v826, %v822
    %v1043 = vpack.c.b16 %v831, %v827
    %v1044 = vpack.c.b16 %v832, %v828
    %v1045 = vpack.c.b16 %v833, %v829
    %v1046 = vpack.c.b16 %v834, %v830
    %v1047 = vpack.c.b16 %v839, %v835
    %v1048 = vpack.c.b16 %v840, %v836
    %v1049 = vpack.c.b16 %v841, %v837
    %v1050 = vpack.c.b16 %v842, %v838
    %v1051 = vpack.c.b16 %v847, %v843
    %v1052 = vpack.c.b16 %v848, %v844
    %v1053 = vpack.c.b16 %v849, %v845
    %v1054 = vpack.c.b16 %v850, %v846
    %v1055 = vpack.c.b16 %v855, %v851
    %v1056 = vpack.c.b16 %v856, %v852
    %v1057 = vpack.c.b16 %v857, %v853
    %v1058 = vpack.c.b16 %v858, %v854
    %v1059 = vpack.c.b16 %v863, %v859
    %v1060 = vpack.c.b16 %v864, %v860
    %v1061 = vpack.c.b16 %v865, %v861
    %v1062 = vpack.c.b16 %v866, %v862
    %vm1259 = vcmask 130048
    %v1261 = vsel %vm1259, %v60, 0
    %1263 = vmatprep.subr.bf16.mxu0 %v868
    %1264 = vmatpush1.bf16.msra.mxu0 %v867
    %1265 = vmatprep.subr.bf16.mxu0 %v872
    %1266 = vmatpush1.bf16.msra.mxu0 %v871
    %1267 = vmatprep.subr.bf16.mxu0 %v876
    %1268 = vmatpush1.bf16.msra.mxu0 %v875
    %1269 = vmatprep.subr.bf16.mxu0 %v880
    %1270 = vmatpush1.bf16.msra.mxu0 %v879
    %1271 = vmatprep.subr.bf16.mxu0 %v884
    %1272 = vmatpush1.bf16.msra.mxu0 %v883
    %1273 = vmatprep.subr.bf16.mxu0 %v888
    %1274 = vmatpush1.bf16.msra.mxu0 %v887
    %1275 = vmatprep.subr.bf16.mxu0 %v892
    %1276 = vmatpush1.bf16.msra.mxu0 %v891
    %1277 = vmatprep.subr.bf16.mxu0 %v896
    %1278 = vmatpush1.bf16.msra.mxu0 %v895
    %1279 = vmatprep.subr.bf16.mxu0 %v900
    %1280 = vmatpush1.bf16.msra.mxu0 %v899
    %1281 = vmatprep.subr.bf16.mxu0 %v904
    %1282 = vmatpush1.bf16.msra.mxu0 %v903
    %1283 = vmatprep.subr.bf16.mxu0 %v908
    %1284 = vmatpush1.bf16.msra.mxu0 %v907
    %1285 = vmatprep.subr.bf16.mxu0 %v912
    %1286 = vmatpush1.bf16.msra.mxu0 %v911
    %1287 = vmatprep.subr.bf16.mxu0 %v916
    %1288 = vmatpush1.bf16.msra.mxu0 %v915
    %1289 = vmatprep.subr.bf16.mxu0 %v920
    %1290 = vmatpush1.bf16.msra.mxu0 %v919
    %1291 = vmatprep.subr.bf16.mxu0 %v924
    %1292 = vmatpush1.bf16.msra.mxu0 %v923
    %1293 = vmatprep.subr.bf16.mxu0 %v928
    %1294 = vmatpush1.bf16.msra.mxu0 %v927
    %1295 = vmatprep.mubr.bf16.mxu0 %v55
    %1296 = vmatmul.mubr.bf16.gmra.mrb[0].mxu0 %v54
    %v1297 = vpop.f32.mrb[0].mxu0
    %v1298 = vadd.f32 %v262, %v1297
    %v1299 = vpop.f32.mrb[0].mxu0
    %v1300 = vadd.f32 %v266, %v1299
    %v1301 = vpop.f32.mrb[0].mxu0
    %v1302 = vpop.f32.mrb[0].mxu0
    %1303 = vdwg.mxu0
    %1304 = vmatprep.subr.bf16.mxu0 %v932
    %1305 = vmatpush1.bf16.msra.mxu0 %v931
    %1306 = vmatprep.subr.bf16.mxu0 %v936
    %1307 = vmatpush1.bf16.msra.mxu0 %v935
    %1308 = vmatprep.subr.bf16.mxu0 %v940
    %1309 = vmatpush1.bf16.msra.mxu0 %v939
    %1310 = vmatprep.subr.bf16.mxu0 %v944
    %1311 = vmatpush1.bf16.msra.mxu0 %v943
    %1312 = vmatprep.subr.bf16.mxu0 %v948
    %1313 = vmatpush1.bf16.msra.mxu0 %v947
    %1314 = vmatprep.subr.bf16.mxu0 %v952
    %1315 = vmatpush1.bf16.msra.mxu0 %v951
    %1316 = vmatprep.subr.bf16.mxu0 %v956
    %1317 = vmatpush1.bf16.msra.mxu0 %v955
    %1318 = vmatprep.subr.bf16.mxu0 %v960
    %1319 = vmatpush1.bf16.msra.mxu0 %v959
    %1320 = vmatprep.subr.bf16.mxu0 %v964
    %1321 = vmatpush1.bf16.msra.mxu0 %v963
    %1322 = vmatprep.subr.bf16.mxu0 %v968
    %1323 = vmatpush1.bf16.msra.mxu0 %v967
    %1324 = vmatprep.subr.bf16.mxu0 %v972
    %1325 = vmatpush1.bf16.msra.mxu0 %v971
    %1326 = vmatprep.subr.bf16.mxu0 %v976
    %1327 = vmatpush1.bf16.msra.mxu0 %v975
    %1328 = vmatprep.subr.bf16.mxu0 %v980
    %1329 = vmatpush1.bf16.msra.mxu0 %v979
    %1330 = vmatprep.subr.bf16.mxu0 %v984
    %1331 = vmatpush1.bf16.msra.mxu0 %v983
    %1332 = vmatprep.subr.bf16.mxu0 %v988
    %1333 = vmatpush1.bf16.msra.mxu0 %v987
    %1334 = vmatprep.subr.bf16.mxu0 %v992
    %1335 = vmatpush1.bf16.msra.mxu0 %v991
    %1336 = vmatprep.mubr.bf16.mxu0 %v57
    %1337 = vmatmul.mubr.bf16.gmra.mrb[0].mxu0 %v56
    %v1338 = vpop.f32.mrb[0].mxu0
    %v1339 = vadd.f32 %v1298, %v1338
    %v1340 = vpop.f32.mrb[0].mxu0
    %v1341 = vadd.f32 %v1300, %v1340
    %v1342 = vpop.f32.mrb[0].mxu0
    %v1343 = vpop.f32.mrb[0].mxu0
    %1344 = vdwg.mxu0
    %1345 = vmatprep.subr.bf16.mxu0 %v996
    %1346 = vmatpush1.bf16.msra.mxu0 %v995
    %1347 = vmatprep.subr.bf16.mxu0 %v1000
    %1348 = vmatpush1.bf16.msra.mxu0 %v999
    %1349 = vmatprep.subr.bf16.mxu0 %v1004
    %1350 = vmatpush1.bf16.msra.mxu0 %v1003
    %1351 = vmatprep.subr.bf16.mxu0 %v1008
    %1352 = vmatpush1.bf16.msra.mxu0 %v1007
    %1353 = vmatprep.subr.bf16.mxu0 %v1012
    %1354 = vmatpush1.bf16.msra.mxu0 %v1011
    %1355 = vmatprep.subr.bf16.mxu0 %v1016
    %1356 = vmatpush1.bf16.msra.mxu0 %v1015
    %1357 = vmatprep.subr.bf16.mxu0 %v1020
    %1358 = vmatpush1.bf16.msra.mxu0 %v1019
    %1359 = vmatprep.subr.bf16.mxu0 %v1024
    %1360 = vmatpush1.bf16.msra.mxu0 %v1023
    %1361 = vmatprep.subr.bf16.mxu0 %v1028
    %1362 = vmatpush1.bf16.msra.mxu0 %v1027
    %1363 = vmatprep.subr.bf16.mxu0 %v1032
    %1364 = vmatpush1.bf16.msra.mxu0 %v1031
    %1365 = vmatprep.subr.bf16.mxu0 %v1036
    %1366 = vmatpush1.bf16.msra.mxu0 %v1035
    %1367 = vmatprep.subr.bf16.mxu0 %v1040
    %1368 = vmatpush1.bf16.msra.mxu0 %v1039
    %1369 = vmatprep.subr.bf16.mxu0 %v1044
    %1370 = vmatpush1.bf16.msra.mxu0 %v1043
    %1371 = vmatprep.subr.bf16.mxu0 %v1048
    %1372 = vmatpush1.bf16.msra.mxu0 %v1047
    %1373 = vmatprep.subr.bf16.mxu0 %v1052
    %1374 = vmatpush1.bf16.msra.mxu0 %v1051
    %1375 = vmatprep.subr.bf16.mxu0 %v1056
    %1376 = vmatpush1.bf16.msra.mxu0 %v1055
    %1377 = vmatprep.mubr.bf16.mxu0 %v59
    %1378 = vmatmul.mubr.bf16.gmra.mrb[0].mxu0 %v58
    %v1379 = vpop.f32.mrb[0].mxu0
    %v1380 = vadd.f32 %v1339, %v1379
    %v1381 = vpop.f32.mrb[0].mxu0
    %v1382 = vadd.f32 %v1341, %v1381
    %v1383 = vpop.f32.mrb[0].mxu0
    %v1384 = vpop.f32.mrb[0].mxu0
    %1385 = vdwg.mxu0
    %1386 = vmatprep.subr.bf16.mxu0 %v1060
    %1387 = vmatpush1.bf16.msra.mxu0 %v1059
    %1388 = vmatprep.subr.bf16.mxu0 0
    %1389 = vmatpush1.bf16.msra.mxu0 0
    %1390 = vmatprep.subr.bf16.mxu0 0
    %1391 = vmatpush1.bf16.msra.mxu0 0
    %1392 = vmatprep.subr.bf16.mxu0 0
    %1393 = vmatpush1.bf16.msra.mxu0 0
    %1394 = vmatprep.subr.bf16.mxu0 0
    %1395 = vmatpush1.bf16.msra.mxu0 0
    %1396 = vmatprep.subr.bf16.mxu0 0
    %1397 = vmatpush1.bf16.msra.mxu0 0
    %1398 = vmatprep.subr.bf16.mxu0 0
    %1399 = vmatpush1.bf16.msra.mxu0 0
    %1400 = vmatprep.subr.bf16.mxu0 0
    %1401 = vmatpush1.bf16.msra.mxu0 0
    %1402 = vmatprep.subr.bf16.mxu0 0
    %1403 = vmatpush1.bf16.msra.mxu0 0
    %1404 = vmatprep.subr.bf16.mxu0 0
    %1405 = vmatpush1.bf16.msra.mxu0 0
    %1406 = vmatprep.subr.bf16.mxu0 0
    %1407 = vmatpush1.bf16.msra.mxu0 0
    %1408 = vmatprep.subr.bf16.mxu0 0
    %1409 = vmatpush1.bf16.msra.mxu0 0
    %1410 = vmatprep.subr.bf16.mxu0 0
    %1411 = vmatpush1.bf16.msra.mxu0 0
    %1412 = vmatprep.subr.bf16.mxu0 0
    %1413 = vmatpush1.bf16.msra.mxu0 0
    %1414 = vmatprep.subr.bf16.mxu0 0
    %1415 = vmatpush1.bf16.msra.mxu0 0
    %1416 = vmatprep.subr.bf16.mxu0 0
    %1417 = vmatpush1.bf16.msra.mxu0 0
    %1418 = vmatprep.mubr.bf16.mxu0 0
    %1419 = vmatmul.mubr.bf16.gmra.mrb[0].mxu0 %v1261
    %v1420 = vpop.f32.mrb[0].mxu0
    %v1421 = vadd.f32 %v1380, %v1420
    %v1422 = vpop.f32.mrb[0].mxu0
    %v1423 = vadd.f32 %v1382, %v1422
    %v1424 = vpop.f32.mrb[0].mxu0
    %v1425 = vpop.f32.mrb[0].mxu0
    %1426 = vdwg.mxu0
    %1427 = vmatprep.subr.bf16.mxu0 %v870
    %1428 = vmatpush1.bf16.msra.mxu0 %v869
    %1429 = vmatprep.subr.bf16.mxu0 %v874
    %1430 = vmatpush1.bf16.msra.mxu0 %v873
    %1431 = vmatprep.subr.bf16.mxu0 %v878
    %1432 = vmatpush1.bf16.msra.mxu0 %v877
    %1433 = vmatprep.subr.bf16.mxu0 %v882
    %1434 = vmatpush1.bf16.msra.mxu0 %v881
    %1435 = vmatprep.subr.bf16.mxu0 %v886
    %1436 = vmatpush1.bf16.msra.mxu0 %v885
    %1437 = vmatprep.subr.bf16.mxu0 %v890
    %1438 = vmatpush1.bf16.msra.mxu0 %v889
    %1439 = vmatprep.subr.bf16.mxu0 %v894
    %1440 = vmatpush1.bf16.msra.mxu0 %v893
    %1441 = vmatprep.subr.bf16.mxu0 %v898
    %1442 = vmatpush1.bf16.msra.mxu0 %v897
    %1443 = vmatprep.subr.bf16.mxu0 %v902
    %1444 = vmatpush1.bf16.msra.mxu0 %v901
    %1445 = vmatprep.subr.bf16.mxu0 %v906
    %1446 = vmatpush1.bf16.msra.mxu0 %v905
    %1447 = vmatprep.subr.bf16.mxu0 %v910
    %1448 = vmatpush1.bf16.msra.mxu0 %v909
    %1449 = vmatprep.subr.bf16.mxu0 %v914
    %1450 = vmatpush1.bf16.msra.mxu0 %v913
    %1451 = vmatprep.subr.bf16.mxu0 %v918
    %1452 = vmatpush1.bf16.msra.mxu0 %v917
    %1453 = vmatprep.subr.bf16.mxu0 %v922
    %1454 = vmatpush1.bf16.msra.mxu0 %v921
    %1455 = vmatprep.subr.bf16.mxu0 %v926
    %1456 = vmatpush1.bf16.msra.mxu0 %v925
    %1457 = vmatprep.subr.bf16.mxu0 %v930
    %1458 = vmatpush1.bf16.msra.mxu0 %v929
    %1459 = vmatprep.mubr.bf16.mxu0 %v55
    %1460 = vmatmul.mubr.bf16.gmra.mrb[0].mxu0 %v54
    %v1461 = vpop.f32.mrb[0].mxu0
    %v1462 = vadd.f32 %v270, %v1461
    %v1463 = vpop.f32.mrb[0].mxu0
    %v1464 = vadd.f32 %v274, %v1463
    %v1465 = vpop.f32.mrb[0].mxu0
    %v1466 = vpop.f32.mrb[0].mxu0
    %1467 = vdwg.mxu0
    %1468 = vmatprep.subr.bf16.mxu0 %v934
    %1469 = vmatpush1.bf16.msra.mxu0 %v933
    %1470 = vmatprep.subr.bf16.mxu0 %v938
    %1471 = vmatpush1.bf16.msra.mxu0 %v937
    %1472 = vmatprep.subr.bf16.mxu0 %v942
    %1473 = vmatpush1.bf16.msra.mxu0 %v941
    %1474 = vmatprep.subr.bf16.mxu0 %v946
    %1475 = vmatpush1.bf16.msra.mxu0 %v945
    %1476 = vmatprep.subr.bf16.mxu0 %v950
    %1477 = vmatpush1.bf16.msra.mxu0 %v949
    %1478 = vmatprep.subr.bf16.mxu0 %v954
    %1479 = vmatpush1.bf16.msra.mxu0 %v953
    %1480 = vmatprep.subr.bf16.mxu0 %v958
    %1481 = vmatpush1.bf16.msra.mxu0 %v957
    %1482 = vmatprep.subr.bf16.mxu0 %v962
    %1483 = vmatpush1.bf16.msra.mxu0 %v961
    %1484 = vmatprep.subr.bf16.mxu0 %v966
    %1485 = vmatpush1.bf16.msra.mxu0 %v965
    %1486 = vmatprep.subr.bf16.mxu0 %v970
    %1487 = vmatpush1.bf16.msra.mxu0 %v969
    %1488 = vmatprep.subr.bf16.mxu0 %v974
    %1489 = vmatpush1.bf16.msra.mxu0 %v973
    %1490 = vmatprep.subr.bf16.mxu0 %v978
    %1491 = vmatpush1.bf16.msra.mxu0 %v977
    %1492 = vmatprep.subr.bf16.mxu0 %v982
    %1493 = vmatpush1.bf16.msra.mxu0 %v981
    %1494 = vmatprep.subr.bf16.mxu0 %v986
    %1495 = vmatpush1.bf16.msra.mxu0 %v985
    %1496 = vmatprep.subr.bf16.mxu0 %v990
    %1497 = vmatpush1.bf16.msra.mxu0 %v989
    %1498 = vmatprep.subr.bf16.mxu0 %v994
    %1499 = vmatpush1.bf16.msra.mxu0 %v993
    %1500 = vmatprep.mubr.bf16.mxu0 %v57
    %1501 = vmatmul.mubr.bf16.gmra.mrb[0].mxu0 %v56
    %v1502 = vpop.f32.mrb[0].mxu0
    %v1503 = vadd.f32 %v1462, %v1502
    %v1504 = vpop.f32.mrb[0].mxu0
    %v1505 = vadd.f32 %v1464, %v1504
    %v1506 = vpop.f32.mrb[0].mxu0
    %v1507 = vpop.f32.mrb[0].mxu0
    %1508 = vdwg.mxu0
    %1509 = vmatprep.subr.bf16.mxu0 %v998
    %1510 = vmatpush1.bf16.msra.mxu0 %v997
    %1511 = vmatprep.subr.bf16.mxu0 %v1002
    %1512 = vmatpush1.bf16.msra.mxu0 %v1001
    %1513 = vmatprep.subr.bf16.mxu0 %v1006
    %1514 = vmatpush1.bf16.msra.mxu0 %v1005
    %1515 = vmatprep.subr.bf16.mxu0 %v1010
    %1516 = vmatpush1.bf16.msra.mxu0 %v1009
    %1517 = vmatprep.subr.bf16.mxu0 %v1014
    %1518 = vmatpush1.bf16.msra.mxu0 %v1013
    %1519 = vmatprep.subr.bf16.mxu0 %v1018
    %1520 = vmatpush1.bf16.msra.mxu0 %v1017
    %1521 = vmatprep.subr.bf16.mxu0 %v1022
    %1522 = vmatpush1.bf16.msra.mxu0 %v1021
    %1523 = vmatprep.subr.bf16.mxu0 %v1026
    %1524 = vmatpush1.bf16.msra.mxu0 %v1025
    %1525 = vmatprep.subr.bf16.mxu0 %v1030
    %1526 = vmatpush1.bf16.msra.mxu0 %v1029
    %1527 = vmatprep.subr.bf16.mxu0 %v1034
    %1528 = vmatpush1.bf16.msra.mxu0 %v1033
    %1529 = vmatprep.subr.bf16.mxu0 %v1038
    %1530 = vmatpush1.bf16.msra.mxu0 %v1037
    %1531 = vmatprep.subr.bf16.mxu0 %v1042
    %1532 = vmatpush1.bf16.msra.mxu0 %v1041
    %1533 = vmatprep.subr.bf16.mxu0 %v1046
    %1534 = vmatpush1.bf16.msra.mxu0 %v1045
    %1535 = vmatprep.subr.bf16.mxu0 %v1050
    %1536 = vmatpush1.bf16.msra.mxu0 %v1049
    %1537 = vmatprep.subr.bf16.mxu0 %v1054
    %1538 = vmatpush1.bf16.msra.mxu0 %v1053
    %1539 = vmatprep.subr.bf16.mxu0 %v1058
    %1540 = vmatpush1.bf16.msra.mxu0 %v1057
    %1541 = vmatprep.mubr.bf16.mxu0 %v59
    %1542 = vmatmul.mubr.bf16.gmra.mrb[0].mxu0 %v58
    %v1543 = vpop.f32.mrb[0].mxu0
    %v1544 = vadd.f32 %v1503, %v1543
    %v1545 = vpop.f32.mrb[0].mxu0
    %v1546 = vadd.f32 %v1505, %v1545
    %v1547 = vpop.f32.mrb[0].mxu0
    %v1548 = vpop.f32.mrb[0].mxu0
    %1549 = vdwg.mxu0
    %1550 = vmatprep.subr.bf16.mxu0 %v1062
    %1551 = vmatpush1.bf16.msra.mxu0 %v1061
    %1552 = vmatprep.subr.bf16.mxu0 0
    %1553 = vmatpush1.bf16.msra.mxu0 0
    %1554 = vmatprep.subr.bf16.mxu0 0
    %1555 = vmatpush1.bf16.msra.mxu0 0
    %1556 = vmatprep.subr.bf16.mxu0 0
    %1557 = vmatpush1.bf16.msra.mxu0 0
    %1558 = vmatprep.subr.bf16.mxu0 0
    %1559 = vmatpush1.bf16.msra.mxu0 0
    %1560 = vmatprep.subr.bf16.mxu0 0
    %1561 = vmatpush1.bf16.msra.mxu0 0
    %1562 = vmatprep.subr.bf16.mxu0 0
    %1563 = vmatpush1.bf16.msra.mxu0 0
    %1564 = vmatprep.subr.bf16.mxu0 0
    %1565 = vmatpush1.bf16.msra.mxu0 0
    %1566 = vmatprep.subr.bf16.mxu0 0
    %1567 = vmatpush1.bf16.msra.mxu0 0
    %1568 = vmatprep.subr.bf16.mxu0 0
    %1569 = vmatpush1.bf16.msra.mxu0 0
    %1570 = vmatprep.subr.bf16.mxu0 0
    %1571 = vmatpush1.bf16.msra.mxu0 0
    %1572 = vmatprep.subr.bf16.mxu0 0
    %1573 = vmatpush1.bf16.msra.mxu0 0
    %1574 = vmatprep.subr.bf16.mxu0 0
    %1575 = vmatpush1.bf16.msra.mxu0 0
    %1576 = vmatprep.subr.bf16.mxu0 0
    %1577 = vmatpush1.bf16.msra.mxu0 0
    %1578 = vmatprep.subr.bf16.mxu0 0
    %1579 = vmatpush1.bf16.msra.mxu0 0
    %1580 = vmatprep.subr.bf16.mxu0 0
    %1581 = vmatpush1.bf16.msra.mxu0 0
    %1582 = vmatprep.mubr.bf16.mxu0 0
    %1583 = vmatmul.mubr.bf16.gmra.mrb[0].mxu0 %v1261
    %v1584 = vpop.f32.mrb[0].mxu0
    %v1585 = vadd.f32 %v1544, %v1584
    %v1586 = vpop.f32.mrb[0].mxu0
    %v1587 = vadd.f32 %v1546, %v1586
    %v1588 = vpop.f32.mrb[0].mxu0
    %v1589 = vpop.f32.mrb[0].mxu0
    %1590 = vdwg.mxu0
    %v1591 = vmax.f32 %v1421, 0.0
    %v1592 = vmax.f32 %v1423, 0.0
    %v1593 = vmax.f32 %v1585, 0.0
    %v1594 = vmax.f32 %v1587, 0.0
    %v1595 = vpack.c.bf16 %v1591, %v1591
    %v1596 = vpack.c.bf16 %v1592, %v1592
    %v1597 = vpack.c.bf16 %v1593, %v1593
    %v1598 = vpack.c.bf16 %v1594, %v1594
    %v1599 = vld [vmem:[%s3] sm:$0xff]
    %v1600 = vld [vmem:[%s3 + $0x8] sm:$0xff]
    %v1601 = vld [vmem:[%s3 + $0x10] sm:$0xff]
    %v1602 = vld [vmem:[%s3 + $0x18] sm:$0xff]
    %v1603 = vld [vmem:[%s3 + $0x20] sm:$0xff]
    %v1604 = vld [vmem:[%s3 + $0x28] sm:$0xff]
    %v1605 = vld [vmem:[%s3 + $0x30] sm:$0xff]
    %v1606 = vld [vmem:[%s3 + $0x38] sm:$0xff]
    %v1607 = vld [vmem:[%s3 + $0x40] sm:$0xff]
    %v1608 = vld [vmem:[%s3 + $0x48] sm:$0xff]
    %v1609 = vld [vmem:[%s3 + $0x50] sm:$0xff]
    %v1610 = vld [vmem:[%s3 + $0x58] sm:$0xff]
    %v1611 = vld [vmem:[%s3 + $0x60] sm:$0xff]
    %v1612 = vld [vmem:[%s3 + $0x68] sm:$0xff]
    %v1613 = vld [vmem:[%s3 + $0x70] sm:$0xff]
    %v1614 = vld [vmem:[%s3 + $0x78] sm:$0xff]
    %v1615 = vld [vmem:[%s3 + $0x80] sm:$0xff]
    %v1616 = vld [vmem:[%s3 + $0x88] sm:$0xff]
    %v1617 = vld [vmem:[%s3 + $0x90] sm:$0xff]
    %v1618 = vld [vmem:[%s3 + $0x98] sm:$0xff]
    %v1619 = vld [vmem:[%s3 + $0xa0] sm:$0xff]
    %v1620 = vld [vmem:[%s3 + $0xa8] sm:$0xff]
    %v1621 = vld [vmem:[%s3 + $0xb0] sm:$0xff]
    %v1622 = vld [vmem:[%s3 + $0xb8] sm:$0xff]
    %v1623 = vld [vmem:[%s3 + $0xc0] sm:$0xff]
    %v1624 = vld [vmem:[%s3 + $0xc8] sm:$0xff]
    %v1625 = vld [vmem:[%s3 + $0xd0] sm:$0xff]
    %v1626 = vld [vmem:[%s3 + $0xd8] sm:$0xff]
    %v1627 = vld [vmem:[%s3 + $0xe0] sm:$0xff]
    %v1628 = vld [vmem:[%s3 + $0xe8] sm:$0xff]
    %v1629 = vld [vmem:[%s3 + $0xf0] sm:$0xff]
    %v1630 = vld [vmem:[%s3 + $0xf8] sm:$0xff]
    %v1631 = vld [vmem:[%s3 + $0x100] sm:$0xff]
    %v1632 = vld [vmem:[%s3 + $0x108] sm:$0xff]
    %v1633 = vld [vmem:[%s3 + $0x110] sm:$0xff]
    %v1634 = vld [vmem:[%s3 + $0x118] sm:$0xff]
    %v1635 = vld [vmem:[%s3 + $0x120] sm:$0xff]
    %v1636 = vld [vmem:[%s3 + $0x128] sm:$0xff]
    %v1637 = vld [vmem:[%s3 + $0x130] sm:$0xff]
    %v1638 = vld [vmem:[%s3 + $0x138] sm:$0xff]
    %v1639 = vld [vmem:[%s3 + $0x140] sm:$0xff]
    %v1640 = vld [vmem:[%s3 + $0x148] sm:$0xff]
    %v1641 = vld [vmem:[%s3 + $0x150] sm:$0xff]
    %v1642 = vld [vmem:[%s3 + $0x158] sm:$0xff]
    %v1643 = vld [vmem:[%s3 + $0x160] sm:$0xff]
    %v1644 = vld [vmem:[%s3 + $0x168] sm:$0xff]
    %v1645 = vld [vmem:[%s3 + $0x170] sm:$0xff]
    %v1646 = vld [vmem:[%s3 + $0x178] sm:$0xff]
    %v1647 = vld [vmem:[%s3 + $0x180] sm:$0xff]
    %v1648 = vld [vmem:[%s3 + $0x188] sm:$0xff]
    %v1649 = vld [vmem:[%s3 + $0x190] sm:$0xff]
    %v1650 = vld [vmem:[%s3 + $0x198] sm:$0xff]
    %v1651 = vld [vmem:[%s3 + $0x1a0] sm:$0xff]
    %v1652 = vld [vmem:[%s3 + $0x1a8] sm:$0xff]
    %v1653 = vld [vmem:[%s3 + $0x1b0] sm:$0xff]
    %v1654 = vld [vmem:[%s3 + $0x1b8] sm:$0xff]
    %v1655 = vld [vmem:[%s3 + $0x1c0] sm:$0xff]
    %v1656 = vld [vmem:[%s3 + $0x1c8] sm:$0xff]
    %v1657 = vld [vmem:[%s3 + $0x1d0] sm:$0xff]
    %v1658 = vld [vmem:[%s3 + $0x1d8] sm:$0xff]
    %v1659 = vld [vmem:[%s3 + $0x1e0] sm:$0xff]
    %v1660 = vld [vmem:[%s3 + $0x1e8] sm:$0xff]
    %v1661 = vld [vmem:[%s3 + $0x1f0] sm:$0xff]
    %v1662 = vld [vmem:[%s3 + $0x1f8] sm:$0xff]
    %v1663 = vld [vmem:[%s4] sm:$0x3]
    %v1665 = vlaneseq
    %v1666 = vshrl.u32 %v1665, 7
    %v1667 = vsub.s32 0, %v1666
    %v1668 = vrot.slane %v1663, %v1667
    %v1669 = vlaneseq
    %v1670 = vshrl.u32 %v1669, 7
    %v1671 = vsub.s32 1, %v1670
    %v1672 = vrot.slane %v1663, %v1671
    %v1739 = vunpack.c.l.b16 %v1599
    %v1740 = vunpack.c.h.b16 %v1599
    %v1741 = vunpack.c.l.b16 %v1600
    %v1742 = vunpack.c.h.b16 %v1600
    %v1743 = vunpack.c.l.b16 %v1601
    %v1744 = vunpack.c.h.b16 %v1601
    %v1745 = vunpack.c.l.b16 %v1602
    %v1746 = vunpack.c.h.b16 %v1602
    %v1747 = vunpack.c.l.b16 %v1603
    %v1748 = vunpack.c.h.b16 %v1603
    %v1749 = vunpack.c.l.b16 %v1604
    %v1750 = vunpack.c.h.b16 %v1604
    %v1751 = vunpack.c.l.b16 %v1605
    %v1752 = vunpack.c.h.b16 %v1605
    %v1753 = vunpack.c.l.b16 %v1606
    %v1754 = vunpack.c.h.b16 %v1606
    %v1755 = vunpack.c.l.b16 %v1607
    %v1756 = vunpack.c.h.b16 %v1607
    %v1757 = vunpack.c.l.b16 %v1608
    %v1758 = vunpack.c.h.b16 %v1608
    %v1759 = vunpack.c.l.b16 %v1609
    %v1760 = vunpack.c.h.b16 %v1609
    %v1761 = vunpack.c.l.b16 %v1610
    %v1762 = vunpack.c.h.b16 %v1610
    %v1763 = vunpack.c.l.b16 %v1611
    %v1764 = vunpack.c.h.b16 %v1611
    %v1765 = vunpack.c.l.b16 %v1612
    %v1766 = vunpack.c.h.b16 %v1612
    %v1767 = vunpack.c.l.b16 %v1613
    %v1768 = vunpack.c.h.b16 %v1613
    %v1769 = vunpack.c.l.b16 %v1614
    %v1770 = vunpack.c.h.b16 %v1614
    %v1771 = vunpack.c.l.b16 %v1615
    %v1772 = vunpack.c.h.b16 %v1615
    %v1773 = vunpack.c.l.b16 %v1616
    %v1774 = vunpack.c.h.b16 %v1616
    %v1775 = vunpack.c.l.b16 %v1617
    %v1776 = vunpack.c.h.b16 %v1617
    %v1777 = vunpack.c.l.b16 %v1618
    %v1778 = vunpack.c.h.b16 %v1618
    %v1779 = vunpack.c.l.b16 %v1619
    %v1780 = vunpack.c.h.b16 %v1619
    %v1781 = vunpack.c.l.b16 %v1620
    %v1782 = vunpack.c.h.b16 %v1620
    %v1783 = vunpack.c.l.b16 %v1621
    %v1784 = vunpack.c.h.b16 %v1621
    %v1785 = vunpack.c.l.b16 %v1622
    %v1786 = vunpack.c.h.b16 %v1622
    %v1787 = vunpack.c.l.b16 %v1623
    %v1788 = vunpack.c.h.b16 %v1623
    %v1789 = vunpack.c.l.b16 %v1624
    %v1790 = vunpack.c.h.b16 %v1624
    %v1791 = vunpack.c.l.b16 %v1625
    %v1792 = vunpack.c.h.b16 %v1625
    %v1793 = vunpack.c.l.b16 %v1626
    %v1794 = vunpack.c.h.b16 %v1626
    %v1795 = vunpack.c.l.b16 %v1627
    %v1796 = vunpack.c.h.b16 %v1627
    %v1797 = vunpack.c.l.b16 %v1628
    %v1798 = vunpack.c.h.b16 %v1628
    %v1799 = vunpack.c.l.b16 %v1629
    %v1800 = vunpack.c.h.b16 %v1629
    %v1801 = vunpack.c.l.b16 %v1630
    %v1802 = vunpack.c.h.b16 %v1630
    %v1803 = vunpack.c.l.b16 %v1631
    %v1804 = vunpack.c.h.b16 %v1631
    %v1805 = vunpack.c.l.b16 %v1632
    %v1806 = vunpack.c.h.b16 %v1632
    %v1807 = vunpack.c.l.b16 %v1633
    %v1808 = vunpack.c.h.b16 %v1633
    %v1809 = vunpack.c.l.b16 %v1634
    %v1810 = vunpack.c.h.b16 %v1634
    %v1811 = vunpack.c.l.b16 %v1635
    %v1812 = vunpack.c.h.b16 %v1635
    %v1813 = vunpack.c.l.b16 %v1636
    %v1814 = vunpack.c.h.b16 %v1636
    %v1815 = vunpack.c.l.b16 %v1637
    %v1816 = vunpack.c.h.b16 %v1637
    %v1817 = vunpack.c.l.b16 %v1638
    %v1818 = vunpack.c.h.b16 %v1638
    %v1819 = vunpack.c.l.b16 %v1639
    %v1820 = vunpack.c.h.b16 %v1639
    %v1821 = vunpack.c.l.b16 %v1640
    %v1822 = vunpack.c.h.b16 %v1640
    %v1823 = vunpack.c.l.b16 %v1641
    %v1824 = vunpack.c.h.b16 %v1641
    %v1825 = vunpack.c.l.b16 %v1642
    %v1826 = vunpack.c.h.b16 %v1642
    %v1827 = vunpack.c.l.b16 %v1643
    %v1828 = vunpack.c.h.b16 %v1643
    %v1829 = vunpack.c.l.b16 %v1644
    %v1830 = vunpack.c.h.b16 %v1644
    %v1831 = vunpack.c.l.b16 %v1645
    %v1832 = vunpack.c.h.b16 %v1645
    %v1833 = vunpack.c.l.b16 %v1646
    %v1834 = vunpack.c.h.b16 %v1646
    %v1835 = vunpack.c.l.b16 %v1647
    %v1836 = vunpack.c.h.b16 %v1647
    %v1837 = vunpack.c.l.b16 %v1648
    %v1838 = vunpack.c.h.b16 %v1648
    %v1839 = vunpack.c.l.b16 %v1649
    %v1840 = vunpack.c.h.b16 %v1649
    %v1841 = vunpack.c.l.b16 %v1650
    %v1842 = vunpack.c.h.b16 %v1650
    %v1843 = vunpack.c.l.b16 %v1651
    %v1844 = vunpack.c.h.b16 %v1651
    %v1845 = vunpack.c.l.b16 %v1652
    %v1846 = vunpack.c.h.b16 %v1652
    %v1847 = vunpack.c.l.b16 %v1653
    %v1848 = vunpack.c.h.b16 %v1653
    %v1849 = vunpack.c.l.b16 %v1654
    %v1850 = vunpack.c.h.b16 %v1654
    %v1851 = vunpack.c.l.b16 %v1655
    %v1852 = vunpack.c.h.b16 %v1655
    %v1853 = vunpack.c.l.b16 %v1656
    %v1854 = vunpack.c.h.b16 %v1656
    %v1855 = vunpack.c.l.b16 %v1657
    %v1856 = vunpack.c.h.b16 %v1657
    %v1857 = vunpack.c.l.b16 %v1658
    %v1858 = vunpack.c.h.b16 %v1658
    %v1859 = vunpack.c.l.b16 %v1659
    %v1860 = vunpack.c.h.b16 %v1659
    %v1861 = vunpack.c.l.b16 %v1660
    %v1862 = vunpack.c.h.b16 %v1660
    %v1863 = vunpack.c.l.b16 %v1661
    %v1864 = vunpack.c.h.b16 %v1661
    %v1865 = vunpack.c.l.b16 %v1662
    %v1866 = vunpack.c.h.b16 %v1662
    %v1867 = vpack.c.b16 %v1741, %v1739
    %v1868 = vpack.c.b16 %v1742, %v1740
    %v1869 = vpack.c.b16 %v1745, %v1743
    %v1870 = vpack.c.b16 %v1746, %v1744
    %v1871 = vpack.c.b16 %v1749, %v1747
    %v1872 = vpack.c.b16 %v1750, %v1748
    %v1873 = vpack.c.b16 %v1753, %v1751
    %v1874 = vpack.c.b16 %v1754, %v1752
    %v1875 = vpack.c.b16 %v1757, %v1755
    %v1876 = vpack.c.b16 %v1758, %v1756
    %v1877 = vpack.c.b16 %v1761, %v1759
    %v1878 = vpack.c.b16 %v1762, %v1760
    %v1879 = vpack.c.b16 %v1765, %v1763
    %v1880 = vpack.c.b16 %v1766, %v1764
    %v1881 = vpack.c.b16 %v1769, %v1767
    %v1882 = vpack.c.b16 %v1770, %v1768
    %v1883 = vpack.c.b16 %v1773, %v1771
    %v1884 = vpack.c.b16 %v1774, %v1772
    %v1885 = vpack.c.b16 %v1777, %v1775
    %v1886 = vpack.c.b16 %v1778, %v1776
    %v1887 = vpack.c.b16 %v1781, %v1779
    %v1888 = vpack.c.b16 %v1782, %v1780
    %v1889 = vpack.c.b16 %v1785, %v1783
    %v1890 = vpack.c.b16 %v1786, %v1784
    %v1891 = vpack.c.b16 %v1789, %v1787
    %v1892 = vpack.c.b16 %v1790, %v1788
    %v1893 = vpack.c.b16 %v1793, %v1791
    %v1894 = vpack.c.b16 %v1794, %v1792
    %v1895 = vpack.c.b16 %v1797, %v1795
    %v1896 = vpack.c.b16 %v1798, %v1796
    %v1897 = vpack.c.b16 %v1801, %v1799
    %v1898 = vpack.c.b16 %v1802, %v1800
    %v1899 = vpack.c.b16 %v1805, %v1803
    %v1900 = vpack.c.b16 %v1806, %v1804
    %v1901 = vpack.c.b16 %v1809, %v1807
    %v1902 = vpack.c.b16 %v1810, %v1808
    %v1903 = vpack.c.b16 %v1813, %v1811
    %v1904 = vpack.c.b16 %v1814, %v1812
    %v1905 = vpack.c.b16 %v1817, %v1815
    %v1906 = vpack.c.b16 %v1818, %v1816
    %v1907 = vpack.c.b16 %v1821, %v1819
    %v1908 = vpack.c.b16 %v1822, %v1820
    %v1909 = vpack.c.b16 %v1825, %v1823
    %v1910 = vpack.c.b16 %v1826, %v1824
    %v1911 = vpack.c.b16 %v1829, %v1827
    %v1912 = vpack.c.b16 %v1830, %v1828
    %v1913 = vpack.c.b16 %v1833, %v1831
    %v1914 = vpack.c.b16 %v1834, %v1832
    %v1915 = vpack.c.b16 %v1837, %v1835
    %v1916 = vpack.c.b16 %v1838, %v1836
    %v1917 = vpack.c.b16 %v1841, %v1839
    %v1918 = vpack.c.b16 %v1842, %v1840
    %v1919 = vpack.c.b16 %v1845, %v1843
    %v1920 = vpack.c.b16 %v1846, %v1844
    %v1921 = vpack.c.b16 %v1849, %v1847
    %v1922 = vpack.c.b16 %v1850, %v1848
    %v1923 = vpack.c.b16 %v1853, %v1851
    %v1924 = vpack.c.b16 %v1854, %v1852
    %v1925 = vpack.c.b16 %v1857, %v1855
    %v1926 = vpack.c.b16 %v1858, %v1856
    %v1927 = vpack.c.b16 %v1861, %v1859
    %v1928 = vpack.c.b16 %v1862, %v1860
    %v1929 = vpack.c.b16 %v1865, %v1863
    %v1930 = vpack.c.b16 %v1866, %v1864
    %1995 = vmatprep.subr.bf16.mxu0 %v1868
    %1996 = vmatpush1.bf16.msra.mxu0 %v1867
    %1997 = vmatprep.subr.bf16.mxu0 %v1870
    %1998 = vmatpush1.bf16.msra.mxu0 %v1869
    %1999 = vmatprep.subr.bf16.mxu0 %v1872
    %2000 = vmatpush1.bf16.msra.mxu0 %v1871
    %2001 = vmatprep.subr.bf16.mxu0 %v1874
    %2002 = vmatpush1.bf16.msra.mxu0 %v1873
    %2003 = vmatprep.subr.bf16.mxu0 %v1876
    %2004 = vmatpush1.bf16.msra.mxu0 %v1875
    %2005 = vmatprep.subr.bf16.mxu0 %v1878
    %2006 = vmatpush1.bf16.msra.mxu0 %v1877
    %2007 = vmatprep.subr.bf16.mxu0 %v1880
    %2008 = vmatpush1.bf16.msra.mxu0 %v1879
    %2009 = vmatprep.subr.bf16.mxu0 %v1882
    %2010 = vmatpush1.bf16.msra.mxu0 %v1881
    %2011 = vmatprep.subr.bf16.mxu0 %v1884
    %2012 = vmatpush1.bf16.msra.mxu0 %v1883
    %2013 = vmatprep.subr.bf16.mxu0 %v1886
    %2014 = vmatpush1.bf16.msra.mxu0 %v1885
    %2015 = vmatprep.subr.bf16.mxu0 %v1888
    %2016 = vmatpush1.bf16.msra.mxu0 %v1887
    %2017 = vmatprep.subr.bf16.mxu0 %v1890
    %2018 = vmatpush1.bf16.msra.mxu0 %v1889
    %2019 = vmatprep.subr.bf16.mxu0 %v1892
    %2020 = vmatpush1.bf16.msra.mxu0 %v1891
    %2021 = vmatprep.subr.bf16.mxu0 %v1894
    %2022 = vmatpush1.bf16.msra.mxu0 %v1893
    %2023 = vmatprep.subr.bf16.mxu0 %v1896
    %2024 = vmatpush1.bf16.msra.mxu0 %v1895
    %2025 = vmatprep.subr.bf16.mxu0 %v1898
    %2026 = vmatpush1.bf16.msra.mxu0 %v1897
    %2027 = vmatprep.mubr.bf16.mxu0 %v1596
    %2028 = vmatmul.mubr.bf16.gmra.mrb[0].mxu0 %v1595
    %v2029 = vpop.f32.mrb[0].mxu0
    %v2030 = vadd.f32 %v1668, %v2029
    %v2031 = vpop.f32.mrb[0].mxu0
    %v2032 = vadd.f32 %v1672, %v2031
    %v2033 = vpop.f32.mrb[0].mxu0
    %v2034 = vpop.f32.mrb[0].mxu0
    %2035 = vdwg.mxu0
    %2036 = vmatprep.subr.bf16.mxu0 %v1900
    %2037 = vmatpush1.bf16.msra.mxu0 %v1899
    %2038 = vmatprep.subr.bf16.mxu0 %v1902
    %2039 = vmatpush1.bf16.msra.mxu0 %v1901
    %2040 = vmatprep.subr.bf16.mxu0 %v1904
    %2041 = vmatpush1.bf16.msra.mxu0 %v1903
    %2042 = vmatprep.subr.bf16.mxu0 %v1906
    %2043 = vmatpush1.bf16.msra.mxu0 %v1905
    %2044 = vmatprep.subr.bf16.mxu0 %v1908
    %2045 = vmatpush1.bf16.msra.mxu0 %v1907
    %2046 = vmatprep.subr.bf16.mxu0 %v1910
    %2047 = vmatpush1.bf16.msra.mxu0 %v1909
    %2048 = vmatprep.subr.bf16.mxu0 %v1912
    %2049 = vmatpush1.bf16.msra.mxu0 %v1911
    %2050 = vmatprep.subr.bf16.mxu0 %v1914
    %2051 = vmatpush1.bf16.msra.mxu0 %v1913
    %2052 = vmatprep.subr.bf16.mxu0 %v1916
    %2053 = vmatpush1.bf16.msra.mxu0 %v1915
    %2054 = vmatprep.subr.bf16.mxu0 %v1918
    %2055 = vmatpush1.bf16.msra.mxu0 %v1917
    %2056 = vmatprep.subr.bf16.mxu0 %v1920
    %2057 = vmatpush1.bf16.msra.mxu0 %v1919
    %2058 = vmatprep.subr.bf16.mxu0 %v1922
    %2059 = vmatpush1.bf16.msra.mxu0 %v1921
    %2060 = vmatprep.subr.bf16.mxu0 %v1924
    %2061 = vmatpush1.bf16.msra.mxu0 %v1923
    %2062 = vmatprep.subr.bf16.mxu0 %v1926
    %2063 = vmatpush1.bf16.msra.mxu0 %v1925
    %2064 = vmatprep.subr.bf16.mxu0 %v1928
    %2065 = vmatpush1.bf16.msra.mxu0 %v1927
    %2066 = vmatprep.subr.bf16.mxu0 %v1930
    %2067 = vmatpush1.bf16.msra.mxu0 %v1929
    %2068 = vmatprep.mubr.bf16.mxu0 %v1598
    %2069 = vmatmul.mubr.bf16.gmra.mrb[0].mxu0 %v1597
    %v2070 = vpop.f32.mrb[0].mxu0
    %v2071 = vadd.f32 %v2030, %v2070
    %v2072 = vpop.f32.mrb[0].mxu0
    %v2073 = vadd.f32 %v2032, %v2072
    %v2074 = vpop.f32.mrb[0].mxu0
    %v2075 = vpop.f32.mrb[0].mxu0
    %2076 = vdwg.mxu0
    %v2077 = vmax.f32 %v2071, 0.0
    %v2078 = vmax.f32 %v2073, 0.0
    %v2079 = vpack.c.bf16 %v2077, %v2077
    %v2080 = vpack.c.bf16 %v2078, %v2078
    %v2081 = vld [vmem:[%s5] sm:$0xf]
    %v2082 = vld [vmem:[%s5 + $0x4] sm:$0xf]
    %v2083 = vld [vmem:[%s5 + $0x8] sm:$0xf]
    %v2084 = vld [vmem:[%s5 + $0xc] sm:$0xf]
    %v2085 = vld [vmem:[%s5 + $0x10] sm:$0xf]
    %v2086 = vld [vmem:[%s5 + $0x14] sm:$0xf]
    %v2087 = vld [vmem:[%s5 + $0x18] sm:$0xf]
    %v2088 = vld [vmem:[%s5 + $0x1c] sm:$0xf]
    %v2089 = vld [vmem:[%s5 + $0x20] sm:$0xf]
    %v2090 = vld [vmem:[%s5 + $0x24] sm:$0xf]
    %v2091 = vld [vmem:[%s5 + $0x28] sm:$0xf]
    %v2092 = vld [vmem:[%s5 + $0x2c] sm:$0xf]
    %v2093 = vld [vmem:[%s5 + $0x30] sm:$0xf]
    %v2094 = vld [vmem:[%s5 + $0x34] sm:$0xf]
    %v2095 = vld [vmem:[%s5 + $0x38] sm:$0xf]
    %v2096 = vld [vmem:[%s5 + $0x3c] sm:$0xf]
    %v2097 = vld [vmem:[%s5 + $0x40] sm:$0xf]
    %v2098 = vld [vmem:[%s5 + $0x44] sm:$0xf]
    %v2099 = vld [vmem:[%s5 + $0x48] sm:$0xf]
    %v2100 = vld [vmem:[%s5 + $0x4c] sm:$0xf]
    %v2101 = vld [vmem:[%s5 + $0x50] sm:$0xf]
    %v2102 = vld [vmem:[%s5 + $0x54] sm:$0xf]
    %v2103 = vld [vmem:[%s5 + $0x58] sm:$0xf]
    %v2104 = vld [vmem:[%s5 + $0x5c] sm:$0xf]
    %v2105 = vld [vmem:[%s5 + $0x60] sm:$0xf]
    %v2106 = vld [vmem:[%s5 + $0x64] sm:$0xf]
    %v2107 = vld [vmem:[%s5 + $0x68] sm:$0xf]
    %v2108 = vld [vmem:[%s5 + $0x6c] sm:$0xf]
    %v2109 = vld [vmem:[%s5 + $0x70] sm:$0xf]
    %v2110 = vld [vmem:[%s5 + $0x74] sm:$0xf]
    %v2111 = vld [vmem:[%s5 + $0x78] sm:$0xf]
    %v2112 = vld [vmem:[%s5 + $0x7c] sm:$0xf]
    %v2113 = vld [vmem:[%s6] sm:$0x1]
    %v2115 = vlaneseq
    %v2116 = vshrl.u32 %v2115, 7
    %v2117 = vsub.s32 0, %v2116
    %v2118 = vrot.slane %v2113, %v2117
    %v2152 = vunpack.c.l.b16 %v2081
    %v2153 = vunpack.c.l.b16 %v2082
    %v2154 = vunpack.c.l.b16 %v2083
    %v2155 = vunpack.c.l.b16 %v2084
    %v2156 = vunpack.c.l.b16 %v2085
    %v2157 = vunpack.c.l.b16 %v2086
    %v2158 = vunpack.c.l.b16 %v2087
    %v2159 = vunpack.c.l.b16 %v2088
    %v2160 = vunpack.c.l.b16 %v2089
    %v2161 = vunpack.c.l.b16 %v2090
    %v2162 = vunpack.c.l.b16 %v2091
    %v2163 = vunpack.c.l.b16 %v2092
    %v2164 = vunpack.c.l.b16 %v2093
    %v2165 = vunpack.c.l.b16 %v2094
    %v2166 = vunpack.c.l.b16 %v2095
    %v2167 = vunpack.c.l.b16 %v2096
    %v2168 = vunpack.c.l.b16 %v2097
    %v2169 = vunpack.c.l.b16 %v2098
    %v2170 = vunpack.c.l.b16 %v2099
    %v2171 = vunpack.c.l.b16 %v2100
    %v2172 = vunpack.c.l.b16 %v2101
    %v2173 = vunpack.c.l.b16 %v2102
    %v2174 = vunpack.c.l.b16 %v2103
    %v2175 = vunpack.c.l.b16 %v2104
    %v2176 = vunpack.c.l.b16 %v2105
    %v2177 = vunpack.c.l.b16 %v2106
    %v2178 = vunpack.c.l.b16 %v2107
    %v2179 = vunpack.c.l.b16 %v2108
    %v2180 = vunpack.c.l.b16 %v2109
    %v2181 = vunpack.c.l.b16 %v2110
    %v2182 = vunpack.c.l.b16 %v2111
    %v2183 = vunpack.c.l.b16 %v2112
    %v2184 = vpack.c.b16 %v2153, %v2152
    %v2185 = vpack.c.b16 %v2155, %v2154
    %v2186 = vpack.c.b16 %v2157, %v2156
    %v2187 = vpack.c.b16 %v2159, %v2158
    %v2188 = vpack.c.b16 %v2161, %v2160
    %v2189 = vpack.c.b16 %v2163, %v2162
    %v2190 = vpack.c.b16 %v2165, %v2164
    %v2191 = vpack.c.b16 %v2167, %v2166
    %v2192 = vpack.c.b16 %v2169, %v2168
    %v2193 = vpack.c.b16 %v2171, %v2170
    %v2194 = vpack.c.b16 %v2173, %v2172
    %v2195 = vpack.c.b16 %v2175, %v2174
    %v2196 = vpack.c.b16 %v2177, %v2176
    %v2197 = vpack.c.b16 %v2179, %v2178
    %v2198 = vpack.c.b16 %v2181, %v2180
    %v2199 = vpack.c.b16 %v2183, %v2182
    %2216 = vmatprep.subr.bf16.mxu0 0
    %2217 = vmatpush1.bf16.msra.mxu0 %v2184
    %2218 = vmatprep.subr.bf16.mxu0 0
    %2219 = vmatpush1.bf16.msra.mxu0 %v2185
    %2220 = vmatprep.subr.bf16.mxu0 0
    %2221 = vmatpush1.bf16.msra.mxu0 %v2186
    %2222 = vmatprep.subr.bf16.mxu0 0
    %2223 = vmatpush1.bf16.msra.mxu0 %v2187
    %2224 = vmatprep.subr.bf16.mxu0 0
    %2225 = vmatpush1.bf16.msra.mxu0 %v2188
    %2226 = vmatprep.subr.bf16.mxu0 0
    %2227 = vmatpush1.bf16.msra.mxu0 %v2189
    %2228 = vmatprep.subr.bf16.mxu0 0
    %2229 = vmatpush1.bf16.msra.mxu0 %v2190
    %2230 = vmatprep.subr.bf16.mxu0 0
    %2231 = vmatpush1.bf16.msra.mxu0 %v2191
    %2232 = vmatprep.subr.bf16.mxu0 0
    %2233 = vmatpush1.bf16.msra.mxu0 %v2192
    %2234 = vmatprep.subr.bf16.mxu0 0
    %2235 = vmatpush1.bf16.msra.mxu0 %v2193
    %2236 = vmatprep.subr.bf16.mxu0 0
    %2237 = vmatpush1.bf16.msra.mxu0 %v2194
    %2238 = vmatprep.subr.bf16.mxu0 0
    %2239 = vmatpush1.bf16.msra.mxu0 %v2195
    %2240 = vmatprep.subr.bf16.mxu0 0
    %2241 = vmatpush1.bf16.msra.mxu0 %v2196
    %2242 = vmatprep.subr.bf16.mxu0 0
    %2243 = vmatpush1.bf16.msra.mxu0 %v2197
    %2244 = vmatprep.subr.bf16.mxu0 0
    %2245 = vmatpush1.bf16.msra.mxu0 %v2198
    %2246 = vmatprep.subr.bf16.mxu0 0
    %2247 = vmatpush1.bf16.msra.mxu0 %v2199
    %2248 = vmatprep.mubr.bf16.mxu0 %v2080
    %2249 = vmatmul.mubr.bf16.gmra.mrb[0].mxu0 %v2079
    %v2250 = vpop.f32.mrb[0].mxu0
    %v2251 = vadd.f32 %v2118, %v2250
    %v2252 = vpop.f32.mrb[0].mxu0
    %v2253 = vpop.f32.mrb[0].mxu0
    %v2254 = vpop.f32.mrb[0].mxu0
    %2255 = vdwg.mxu0
    %v2256 = vmax.f32 %v2251, 0.0
    %v2257 = vpack.c.bf16 %v2256, %v2256
    %v2258 = vld [vmem:[%s7] sm:$0xf]
    %v2259 = vld [vmem:[%s7 + $0x4] sm:$0xf]
    %v2260 = vld [vmem:[%s7 + $0x8] sm:$0xf]
    %v2261 = vld [vmem:[%s7 + $0xc] sm:$0xf]
    %v2262 = vld [vmem:[%s7 + $0x10] sm:$0xf]
    %v2263 = vld [vmem:[%s7 + $0x14] sm:$0xf]
    %v2264 = vld [vmem:[%s7 + $0x18] sm:$0xf]
    %v2265 = vld [vmem:[%s7 + $0x1c] sm:$0xf]
    %v2266 = vld [vmem:[%s7 + $0x20] sm:$0xf]
    %v2267 = vld [vmem:[%s7 + $0x24] sm:$0xf]
    %v2268 = vld [vmem:[%s7 + $0x28] sm:$0xf]
    %v2269 = vld [vmem:[%s7 + $0x2c] sm:$0xf]
    %v2270 = vld [vmem:[%s7 + $0x30] sm:$0xf]
    %v2271 = vld [vmem:[%s7 + $0x34] sm:$0xf]
    %v2272 = vld [vmem:[%s7 + $0x38] sm:$0xf]
    %v2273 = vld [vmem:[%s7 + $0x3c] sm:$0xf]
    %v2274 = vld [vmem:[%s8] sm:$0x1]
    %v2276 = vlaneseq
    %v2277 = vshrl.u32 %v2276, 7
    %v2278 = vsub.s32 0, %v2277
    %v2279 = vrot.slane %v2274, %v2278
    %v2297 = vunpack.c.l.b16 %v2258
    %v2298 = vunpack.c.l.b16 %v2259
    %v2299 = vunpack.c.l.b16 %v2260
    %v2300 = vunpack.c.l.b16 %v2261
    %v2301 = vunpack.c.l.b16 %v2262
    %v2302 = vunpack.c.l.b16 %v2263
    %v2303 = vunpack.c.l.b16 %v2264
    %v2304 = vunpack.c.l.b16 %v2265
    %v2305 = vunpack.c.l.b16 %v2266
    %v2306 = vunpack.c.l.b16 %v2267
    %v2307 = vunpack.c.l.b16 %v2268
    %v2308 = vunpack.c.l.b16 %v2269
    %v2309 = vunpack.c.l.b16 %v2270
    %v2310 = vunpack.c.l.b16 %v2271
    %v2311 = vunpack.c.l.b16 %v2272
    %v2312 = vunpack.c.l.b16 %v2273
    %v2313 = vpack.c.b16 %v2298, %v2297
    %v2314 = vpack.c.b16 %v2300, %v2299
    %v2315 = vpack.c.b16 %v2302, %v2301
    %v2316 = vpack.c.b16 %v2304, %v2303
    %v2317 = vpack.c.b16 %v2306, %v2305
    %v2318 = vpack.c.b16 %v2308, %v2307
    %v2319 = vpack.c.b16 %v2310, %v2309
    %v2320 = vpack.c.b16 %v2312, %v2311
    %2329 = vmatprep.subr.bf16.mxu0 0
    %2330 = vmatpush1.bf16.msra.mxu0 %v2313
    %2331 = vmatprep.subr.bf16.mxu0 0
    %2332 = vmatpush1.bf16.msra.mxu0 %v2314
    %2333 = vmatprep.subr.bf16.mxu0 0
    %2334 = vmatpush1.bf16.msra.mxu0 %v2315
    %2335 = vmatprep.subr.bf16.mxu0 0
    %2336 = vmatpush1.bf16.msra.mxu0 %v2316
    %2337 = vmatprep.subr.bf16.mxu0 0
    %2338 = vmatpush1.bf16.msra.mxu0 %v2317
    %2339 = vmatprep.subr.bf16.mxu0 0
    %2340 = vmatpush1.bf16.msra.mxu0 %v2318
    %2341 = vmatprep.subr.bf16.mxu0 0
    %2342 = vmatpush1.bf16.msra.mxu0 %v2319
    %2343 = vmatprep.subr.bf16.mxu0 0
    %2344 = vmatpush1.bf16.msra.mxu0 %v2320
    %2345 = vmatprep.subr.bf16.mxu0 0
    %2346 = vmatpush1.bf16.msra.mxu0 0
    %2347 = vmatprep.subr.bf16.mxu0 0
    %2348 = vmatpush1.bf16.msra.mxu0 0
    %2349 = vmatprep.subr.bf16.mxu0 0
    %2350 = vmatpush1.bf16.msra.mxu0 0
    %2351 = vmatprep.subr.bf16.mxu0 0
    %2352 = vmatpush1.bf16.msra.mxu0 0
    %2353 = vmatprep.subr.bf16.mxu0 0
    %2354 = vmatpush1.bf16.msra.mxu0 0
    %2355 = vmatprep.subr.bf16.mxu0 0
    %2356 = vmatpush1.bf16.msra.mxu0 0
    %2357 = vmatprep.subr.bf16.mxu0 0
    %2358 = vmatpush1.bf16.msra.mxu0 0
    %2359 = vmatprep.subr.bf16.mxu0 0
    %2360 = vmatpush1.bf16.msra.mxu0 0
    %2361 = vmatprep.mubr.bf16.mxu0 0
    %2362 = vmatmul.mubr.bf16.gmra.mrb[0].mxu0 %v2257
    %v2363 = vpop.f32.mrb[0].mxu0
    %v2364 = vadd.f32 %v2279, %v2363
    %v2365 = vpop.f32.mrb[0].mxu0
    %v2366 = vpop.f32.mrb[0].mxu0
    %v2367 = vpop.f32.mrb[0].mxu0
    %2368 = vdwg.mxu0
    %v2369 = vpack.c.bf16 %v2364, %v2364
    %2370 = vst [vmem:[%s9] sm:$0xf] %v2369
    // Predicated region
    $region42: #{fcnet_forward.1} parent=1 // pred_check
      _
    $region43: #{fcnet_forward.1} parent=1 // pred_check_branch
      %2372 = sbr.rel (0) target = $region45
    $region44: #{fcnet_forward.1} parent=1 // pred_region
      _
    $region45: #{fcnet_forward.1} parent=1 // pred_fallthru
      _
    // Predicated region
    $region46: #{fcnet_forward.1} parent=1 // pred_check
      _
    $region47: #{fcnet_forward.1} parent=1 // pred_check_branch
      %2374 = sbr.rel (0) target = $region49
    $region48: #{fcnet_forward.1} parent=1 // pred_region
      _
    $region49: #{fcnet_forward.1} parent=1 // pred_fallthru
      _
    %2375 = vsyncpa [#allocation3], 1

</llo_original>
